<compile_context>
chip_gen: v6e
topology: v6e:2x2x1
jax: 0.10.0
libtpu: 0.0.40
codegen_flags: <defaults>
</compile_context>

<pallas_src>
import jax
import jax.numpy as jnp
from jax import lax
from jax.experimental import pallas as pl
from jax.experimental.pallas import tpu as pltpu


# -----------------------------------------------------------------------------
# Fused kernel: all LSTM layers + fc in one body, recurrence unrolled in time.
# -----------------------------------------------------------------------------
def _make_fused_kernel(num_layers, T, B_pad, H):
    def kernel(*refs):
        # --- unpack flat ref list: x, per-layer weights, fc, out ---
        idx = 0
        x_ref = refs[idx]; idx += 1
        layer_refs = []
        for layer in range(num_layers):
            if layer == 0:
                layer_refs.append(refs[idx:idx + 3]); idx += 3   # wih_t, whh_t, bias
            else:
                layer_refs.append(refs[idx:idx + 2]); idx += 2   # w_cat, bias
        wfc_ref, bfc_ref, out_ref = refs[idx], refs[idx + 1], refs[idx + 2]

        # --- gate-activation constants (hoisted out of all loops) ---
        # PyTorch gate order along 4H lanes: [i | f | g | o]; i/f/o are sigmoid,
        # g is tanh. sigmoid(x) = 0.5*tanh(0.5*x) + 0.5, so one lane-masked tanh
        # pass activates the whole gates vreg.
        lane = lax.broadcasted_iota(jnp.int32, (1, 4 * H), 1)
        is_g = (lane >= 2 * H) & (lane < 3 * H)
        pre = jnp.where(is_g, jnp.float32(1.0), jnp.float32(0.5))
        post = jnp.where(is_g, jnp.float32(0.0), jnp.float32(0.5))
        pre = jnp.broadcast_to(pre, (B_pad, 4 * H))     # hoisted broadcasts
        post = jnp.broadcast_to(post, (B_pad, 4 * H))

        def lstm_step(gates, c):
            act = jnp.tanh(gates * pre) * pre + post    # EUP pass #1: all 4 gates
            i_g = act[:, 0 * H:1 * H]
            f_g = act[:, 1 * H:2 * H]
            g_g = act[:, 2 * H:3 * H]
            o_g = act[:, 3 * H:4 * H]
            c = f_g * c + i_g * g_g
            h = o_g * jnp.tanh(c)                       # EUP pass #2
            return h, c

        zeros = jnp.zeros((B_pad, H), jnp.float32)

        # --- layer 0: hoisted input projection (one big MXU call, bias folded),
        #     then the serial recurrence with a single (8,H)@(H,4H) dot/step ---
        wih_ref, whh_ref, b_ref = layer_refs[0]
        whh = whh_ref[...]
        gx = (jnp.dot(x_ref[...], wih_ref[...], preferred_element_type=jnp.float32)
              + b_ref[...])                              # (T*B_pad, 4H), time-major
        h, c = zeros, zeros
        hs = []
        # T is small -> fully unrolled static time loop (max LLO visibility,
        # h/c stay in vregs). For large T use lax.fori_loop(..., unroll=2-4).
        for t in range(T):
            gates = gx[t * B_pad:(t + 1) * B_pad, :] + jnp.dot(
                h, whh, preferred_element_type=jnp.float32)
            h, c = lstm_step(gates, c)
            hs.append(h)

        # --- layers >= 1: per-step fused [h_lower_t | h_{t-1}] @ W_cat ---
        # (no hoisted projection, no T-way sublane concatenate between layers)
        for layer in range(1, num_layers):
            w_ref, b_ref = layer_refs[layer]
            w_cat = w_ref[...]                           # (2H, 4H)
            bias = jnp.broadcast_to(b_ref[...], (B_pad, 4 * H))
            h, c = zeros, zeros
            new_hs = []
            for t in range(T):
                xin = jnp.concatenate([hs[t], h], axis=1)        # (B_pad, 2H)
                gates = jnp.dot(xin, w_cat, preferred_element_type=jnp.float32) + bias
                h, c = lstm_step(gates, c)
                new_hs.append(h)
            hs = new_hs

        # --- fused final Linear on the last timestep only ---
        out_ref[...] = (jnp.dot(hs[T - 1], wfc_ref[...],
                                preferred_element_type=jnp.float32)
                        + bfc_ref[...])

    return kernel


# -----------------------------------------------------------------------------
# Wrapper
# -----------------------------------------------------------------------------
@jax.jit
def lstm_model_forward(kparams, x_bti):
    """x_bti: (B, T, I) batch_first, like the PyTorch module. Returns (B, O)."""
    B, T, I = x_bti.shape
    layers = kparams["lstm"]
    num_layers = len(layers)
    H = layers[0]["whh_t"].shape[0]
    O = kparams["fc"]["w_t"].shape[1]
    B_pad = ((B + 7) // 8) * 8                  # sublane-pad the batch

    # Tiny XLA prep: time-major, pad batch to a full sublane tile, flatten.
    x_tbi = jnp.transpose(x_bti, (1, 0, 2)).astype(jnp.float32)   # (T, B, I)
    if B_pad != B:
        x_tbi = jnp.pad(x_tbi, ((0, 0), (0, B_pad - B), (0, 0)))
    x2d = x_tbi.reshape(T * B_pad, I)

    vmem = pl.BlockSpec(memory_space=pltpu.MemorySpace.VMEM)      # no grid -> no pipelining
    args = [x2d]
    in_specs = [vmem]
    for layer, lp in enumerate(layers):
        if layer == 0:
            args += [lp["wih_t"], lp["whh_t"], lp["bias"]]
            in_specs += [vmem] * 3
        else:
            args += [lp["w_cat"], lp["bias"]]
            in_specs += [vmem] * 2
    args += [kparams["fc"]["w_t"], kparams["fc"]["bias"]]
    in_specs += [vmem] * 2

    out_pad = pl.pallas_call(
        _make_fused_kernel(num_layers, T, B_pad, H),
        out_shape=jax.ShapeDtypeStruct((B_pad, O), jnp.float32),
        in_specs=in_specs,
        out_specs=vmem,
    )(*args)
    return out_pad[:B]                           # trim the padded batch rows


# -----------------------------------------------------------------------------
# Params (PyTorch layout, U(-1/sqrt(H), 1/sqrt(H)) init) + kernel-layout prep
# -----------------------------------------------------------------------------
def init_params(key, input_size, hidden_size, output_size, num_layers):
    k = 1.0 / jnp.sqrt(jnp.asarray(hidden_size, jnp.float32))
    lstm = []
    for layer in range(num_layers):
        in_dim = input_size if layer == 0 else hidden_size
        key, k1, k2, k3, k4 = jax.random.split(key, 5)
        lstm.append({
            "w_ih": jax.random.uniform(k1, (4 * hidden_size, in_dim), jnp.float32, -k, k),
            "w_hh": jax.random.uniform(k2, (4 * hidden_size, hidden_size), jnp.float32, -k, k),
            "b_ih": jax.random.uniform(k3, (4 * hidden_size,), jnp.float32, -k, k),
            "b_hh": jax.random.uniform(k4, (4 * hidden_size,), jnp.float32, -k, k),
        })
    key, k1, k2 = jax.random.split(key, 3)
    fc = {"w": jax.random.uniform(k1, (output_size, hidden_size), jnp.float32, -k, k),
          "b": jax.random.uniform(k2, (output_size,), jnp.float32, -k, k)}
    return {"lstm": lstm, "fc": fc}


def prepare_params(raw):
    """Kernel layout: pre-transposed weights, folded biases, fused W_cat for layers >= 1."""
    layers = []
    for i, lp in enumerate(raw["lstm"]):
        bias = (lp["b_ih"] + lp["b_hh"])[None, :]                 # (1, 4H)
        if i == 0:
            layers.append({"wih_t": lp["w_ih"].T,                 # (I, 4H)
                           "whh_t": lp["w_hh"].T,                 # (H, 4H)
                           "bias": bias})
        else:
            layers.append({"w_cat": jnp.concatenate([lp["w_ih"].T, lp["w_hh"].T], axis=0),
                           "bias": bias})                         # (2H, 4H)
    fc = {"w_t": raw["fc"]["w"].T, "bias": raw["fc"]["b"][None, :]}
    return {"lstm": layers, "fc": fc}


# -----------------------------------------------------------------------------
# Pure-JAX reference (independent, naive per-step formulation, PyTorch layout)
# -----------------------------------------------------------------------------
def lstm_model_ref(raw, x_bti):
    x = jnp.transpose(x_bti, (1, 0, 2)).astype(jnp.float32)       # (T, B, I)
    for lp in raw["lstm"]:
        T, B, _ = x.shape
        H = lp["w_hh"].shape[1]
        h = jnp.zeros((B, H), jnp.float32)
        c = jnp.zeros((B, H), jnp.float32)
        outs = []
        for t in range(T):
            gates = x[t] @ lp["w_ih"].T + h @ lp["w_hh"].T + lp["b_ih"] + lp["b_hh"]
            i_g = jax.nn.sigmoid(gates[:, 0 * H:1 * H])
            f_g = jax.nn.sigmoid(gates[:, 1 * H:2 * H])
            g_g = jnp.tanh(gates[:, 2 * H:3 * H])
            o_g = jax.nn.sigmoid(gates[:, 3 * H:4 * H])
            c = f_g * c + i_g * g_g
            h = o_g * jnp.tanh(c)
            outs.append(h)
        x = jnp.stack(outs, axis=0)
    return x[-1] @ raw["fc"]["w"].T + raw["fc"]["b"]


if __name__ == "__main__":
    INPUT_SIZE = 8
    HIDDEN_SIZE = 32
    OUTPUT_SIZE = 4
    NUM_LAYERS = 2
    B, T = 2, 8

    key = jax.random.PRNGKey(0)
    key, pkey, xkey = jax.random.split(key, 3)
    raw_params = init_params(pkey, INPUT_SIZE, HIDDEN_SIZE, OUTPUT_SIZE, NUM_LAYERS)
    kparams = prepare_params(raw_params)
    x = jax.random.normal(xkey, (B, T, INPUT_SIZE), jnp.float32)

    out = lstm_model_forward(kparams, x)
    out = jax.block_until_ready(out)
    assert out.shape == (B, OUTPUT_SIZE), out.shape

    ref = lstm_model_ref(raw_params, x)
    max_err = jnp.max(jnp.abs(out - ref))
    assert jnp.allclose(out, ref, atol=1e-4, rtol=1e-4), f"max err {max_err}"

    print("KERNEL_OK")
</pallas_src>

<mosaic_0001>
module attributes {stable_mosaic.version = 11 : i64} {
  func.func @kernel(%arg0: memref<64x8xf32, #tpu.memory_space<vmem>>, %arg1: memref<8x128xf32, #tpu.memory_space<vmem>>, %arg2: memref<32x128xf32, #tpu.memory_space<vmem>>, %arg3: memref<1x128xf32, #tpu.memory_space<vmem>>, %arg4: memref<64x128xf32, #tpu.memory_space<vmem>>, %arg5: memref<1x128xf32, #tpu.memory_space<vmem>>, %arg6: memref<32x4xf32, #tpu.memory_space<vmem>>, %arg7: memref<1x4xf32, #tpu.memory_space<vmem>>, %arg8: memref<8x4xf32, #tpu.memory_space<vmem>>) attributes {dimension_semantics = [], scalar_prefetch = 0 : i64, scratch_operands = 0 : i64, tpu.core_type = #tpu.core_type<tc>} {
    %0 = tpu.iota {dimensions = array<i32: 1>} : vector<1x128xi32>
    %c64_i32 = arith.constant 64 : i32
    %1 = vector.broadcast %c64_i32 : i32 to vector<1x128xi32>
    %2 = arith.cmpi sge, %0, %1 : vector<1x128xi32>
    %c96_i32 = arith.constant 96 : i32
    %3 = vector.broadcast %c96_i32 : i32 to vector<1x128xi32>
    %4 = arith.cmpi slt, %0, %3 : vector<1x128xi32>
    %5 = arith.andi %2, %4 : vector<1x128xi1>
    %cst = arith.constant 1.000000e+00 : f32
    %cst_0 = arith.constant 5.000000e-01 : f32
    %6 = vector.broadcast %cst : f32 to vector<1x128xf32>
    %7 = vector.broadcast %cst_0 : f32 to vector<1x128xf32>
    %8 = arith.select %5, %6, %7 : vector<1x128xi1>, vector<1x128xf32>
    %cst_1 = arith.constant 0.000000e+00 : f32
    %cst_2 = arith.constant 5.000000e-01 : f32
    %9 = vector.broadcast %cst_1 : f32 to vector<1x128xf32>
    %10 = vector.broadcast %cst_2 : f32 to vector<1x128xf32>
    %11 = arith.select %5, %9, %10 : vector<1x128xi1>, vector<1x128xf32>
    %12 = vector.shape_cast %8 : vector<1x128xf32> to vector<1x128xf32>
    %13 = vector.broadcast %12 : vector<1x128xf32> to vector<8x128xf32>
    %14 = vector.shape_cast %11 : vector<1x128xf32> to vector<1x128xf32>
    %15 = vector.broadcast %14 : vector<1x128xf32> to vector<8x128xf32>
    %cst_3 = arith.constant 0.000000e+00 : f32
    %16 = vector.broadcast %cst_3 : f32 to vector<8x32xf32>
    %c0 = arith.constant 0 : index
    %c0_4 = arith.constant 0 : index
    %17 = vector.load %arg2[%c0, %c0_4] : memref<32x128xf32, #tpu.memory_space<vmem>>, vector<32x128xf32>
    %c0_5 = arith.constant 0 : index
    %c0_6 = arith.constant 0 : index
    %18 = vector.load %arg0[%c0_5, %c0_6] : memref<64x8xf32, #tpu.memory_space<vmem>>, vector<64x8xf32>
    %c0_7 = arith.constant 0 : index
    %c0_8 = arith.constant 0 : index
    %19 = vector.load %arg1[%c0_7, %c0_8] : memref<8x128xf32, #tpu.memory_space<vmem>>, vector<8x128xf32>
    %cst_9 = arith.constant dense<0.000000e+00> : vector<64x128xf32>
    %20 = tpu.matmul %18, %19, %cst_9 {dimension_numbers = #tpu.dot_dimension_numbers<[1], [0], [0], [1], [0, 0, 1, 1], [], []>} : vector<64x8xf32>, vector<8x128xf32>, vector<64x128xf32> -> vector<64x128xf32>
    %c0_10 = arith.constant 0 : index
    %c0_11 = arith.constant 0 : index
    %21 = vector.load %arg3[%c0_10, %c0_11] : memref<1x128xf32, #tpu.memory_space<vmem>>, vector<1x128xf32>
    %22 = vector.broadcast %21 : vector<1x128xf32> to vector<64x128xf32>
    %23 = arith.addf %20, %22 : vector<64x128xf32>
    %24 = vector.extract_strided_slice %23 {offsets = [0, 0], sizes = [8, 128], strides = [1, 1]} : vector<64x128xf32> to vector<8x128xf32>
    %cst_12 = arith.constant dense<0.000000e+00> : vector<8x128xf32>
    %25 = tpu.matmul %16, %17, %cst_12 {dimension_numbers = #tpu.dot_dimension_numbers<[1], [0], [0], [1], [0, 0, 1, 1], [], []>} : vector<8x32xf32>, vector<32x128xf32>, vector<8x128xf32> -> vector<8x128xf32>
    %26 = arith.addf %24, %25 : vector<8x128xf32>
    %27 = arith.mulf %26, %13 : vector<8x128xf32>
    %28 = math.tanh %27 : vector<8x128xf32>
    %29 = arith.mulf %28, %13 : vector<8x128xf32>
    %30 = arith.addf %29, %15 : vector<8x128xf32>
    %31 = vector.extract_strided_slice %30 {offsets = [0, 0], sizes = [8, 32], strides = [1, 1]} : vector<8x128xf32> to vector<8x32xf32>
    %32 = vector.extract_strided_slice %30 {offsets = [0, 32], sizes = [8, 32], strides = [1, 1]} : vector<8x128xf32> to vector<8x32xf32>
    %33 = vector.extract_strided_slice %30 {offsets = [0, 64], sizes = [8, 32], strides = [1, 1]} : vector<8x128xf32> to vector<8x32xf32>
    %34 = vector.extract_strided_slice %30 {offsets = [0, 96], sizes = [8, 32], strides = [1, 1]} : vector<8x128xf32> to vector<8x32xf32>
    %35 = arith.mulf %32, %16 : vector<8x32xf32>
    %36 = arith.mulf %31, %33 : vector<8x32xf32>
    %37 = arith.addf %35, %36 : vector<8x32xf32>
    %38 = math.tanh %37 : vector<8x32xf32>
    %39 = arith.mulf %34, %38 : vector<8x32xf32>
    %40 = vector.extract_strided_slice %23 {offsets = [8, 0], sizes = [8, 128], strides = [1, 1]} : vector<64x128xf32> to vector<8x128xf32>
    %cst_13 = arith.constant dense<0.000000e+00> : vector<8x128xf32>
    %41 = tpu.matmul %39, %17, %cst_13 {dimension_numbers = #tpu.dot_dimension_numbers<[1], [0], [0], [1], [0, 0, 1, 1], [], []>} : vector<8x32xf32>, vector<32x128xf32>, vector<8x128xf32> -> vector<8x128xf32>
    %42 = arith.addf %40, %41 : vector<8x128xf32>
    %43 = arith.mulf %42, %13 : vector<8x128xf32>
    %44 = math.tanh %43 : vector<8x128xf32>
    %45 = arith.mulf %44, %13 : vector<8x128xf32>
    %46 = arith.addf %45, %15 : vector<8x128xf32>
    %47 = vector.extract_strided_slice %46 {offsets = [0, 0], sizes = [8, 32], strides = [1, 1]} : vector<8x128xf32> to vector<8x32xf32>
    %48 = vector.extract_strided_slice %46 {offsets = [0, 32], sizes = [8, 32], strides = [1, 1]} : vector<8x128xf32> to vector<8x32xf32>
    %49 = vector.extract_strided_slice %46 {offsets = [0, 64], sizes = [8, 32], strides = [1, 1]} : vector<8x128xf32> to vector<8x32xf32>
    %50 = vector.extract_strided_slice %46 {offsets = [0, 96], sizes = [8, 32], strides = [1, 1]} : vector<8x128xf32> to vector<8x32xf32>
    %51 = arith.mulf %48, %37 : vector<8x32xf32>
    %52 = arith.mulf %47, %49 : vector<8x32xf32>
    %53 = arith.addf %51, %52 : vector<8x32xf32>
    %54 = math.tanh %53 : vector<8x32xf32>
    %55 = arith.mulf %50, %54 : vector<8x32xf32>
    %56 = vector.extract_strided_slice %23 {offsets = [16, 0], sizes = [8, 128], strides = [1, 1]} : vector<64x128xf32> to vector<8x128xf32>
    %cst_14 = arith.constant dense<0.000000e+00> : vector<8x128xf32>
    %57 = tpu.matmul %55, %17, %cst_14 {dimension_numbers = #tpu.dot_dimension_numbers<[1], [0], [0], [1], [0, 0, 1, 1], [], []>} : vector<8x32xf32>, vector<32x128xf32>, vector<8x128xf32> -> vector<8x128xf32>
    %58 = arith.addf %56, %57 : vector<8x128xf32>
    %59 = arith.mulf %58, %13 : vector<8x128xf32>
    %60 = math.tanh %59 : vector<8x128xf32>
    %61 = arith.mulf %60, %13 : vector<8x128xf32>
    %62 = arith.addf %61, %15 : vector<8x128xf32>
    %63 = vector.extract_strided_slice %62 {offsets = [0, 0], sizes = [8, 32], strides = [1, 1]} : vector<8x128xf32> to vector<8x32xf32>
    %64 = vector.extract_strided_slice %62 {offsets = [0, 32], sizes = [8, 32], strides = [1, 1]} : vector<8x128xf32> to vector<8x32xf32>
    %65 = vector.extract_strided_slice %62 {offsets = [0, 64], sizes = [8, 32], strides = [1, 1]} : vector<8x128xf32> to vector<8x32xf32>
    %66 = vector.extract_strided_slice %62 {offsets = [0, 96], sizes = [8, 32], strides = [1, 1]} : vector<8x128xf32> to vector<8x32xf32>
    %67 = arith.mulf %64, %53 : vector<8x32xf32>
    %68 = arith.mulf %63, %65 : vector<8x32xf32>
    %69 = arith.addf %67, %68 : vector<8x32xf32>
    %70 = math.tanh %69 : vector<8x32xf32>
    %71 = arith.mulf %66, %70 : vector<8x32xf32>
    %72 = vector.extract_strided_slice %23 {offsets = [24, 0], sizes = [8, 128], strides = [1, 1]} : vector<64x128xf32> to vector<8x128xf32>
    %cst_15 = arith.constant dense<0.000000e+00> : vector<8x128xf32>
    %73 = tpu.matmul %71, %17, %cst_15 {dimension_numbers = #tpu.dot_dimension_numbers<[1], [0], [0], [1], [0, 0, 1, 1], [], []>} : vector<8x32xf32>, vector<32x128xf32>, vector<8x128xf32> -> vector<8x128xf32>
    %74 = arith.addf %72, %73 : vector<8x128xf32>
    %75 = arith.mulf %74, %13 : vector<8x128xf32>
    %76 = math.tanh %75 : vector<8x128xf32>
    %77 = arith.mulf %76, %13 : vector<8x128xf32>
    %78 = arith.addf %77, %15 : vector<8x128xf32>
    %79 = vector.extract_strided_slice %78 {offsets = [0, 0], sizes = [8, 32], strides = [1, 1]} : vector<8x128xf32> to vector<8x32xf32>
    %80 = vector.extract_strided_slice %78 {offsets = [0, 32], sizes = [8, 32], strides = [1, 1]} : vector<8x128xf32> to vector<8x32xf32>
    %81 = vector.extract_strided_slice %78 {offsets = [0, 64], sizes = [8, 32], strides = [1, 1]} : vector<8x128xf32> to vector<8x32xf32>
    %82 = vector.extract_strided_slice %78 {offsets = [0, 96], sizes = [8, 32], strides = [1, 1]} : vector<8x128xf32> to vector<8x32xf32>
    %83 = arith.mulf %80, %69 : vector<8x32xf32>
    %84 = arith.mulf %79, %81 : vector<8x32xf32>
    %85 = arith.addf %83, %84 : vector<8x32xf32>
    %86 = math.tanh %85 : vector<8x32xf32>
    %87 = arith.mulf %82, %86 : vector<8x32xf32>
    %88 = vector.extract_strided_slice %23 {offsets = [32, 0], sizes = [8, 128], strides = [1, 1]} : vector<64x128xf32> to vector<8x128xf32>
    %cst_16 = arith.constant dense<0.000000e+00> : vector<8x128xf32>
    %89 = tpu.matmul %87, %17, %cst_16 {dimension_numbers = #tpu.dot_dimension_numbers<[1], [0], [0], [1], [0, 0, 1, 1], [], []>} : vector<8x32xf32>, vector<32x128xf32>, vector<8x128xf32> -> vector<8x128xf32>
    %90 = arith.addf %88, %89 : vector<8x128xf32>
    %91 = arith.mulf %90, %13 : vector<8x128xf32>
    %92 = math.tanh %91 : vector<8x128xf32>
    %93 = arith.mulf %92, %13 : vector<8x128xf32>
    %94 = arith.addf %93, %15 : vector<8x128xf32>
    %95 = vector.extract_strided_slice %94 {offsets = [0, 0], sizes = [8, 32], strides = [1, 1]} : vector<8x128xf32> to vector<8x32xf32>
    %96 = vector.extract_strided_slice %94 {offsets = [0, 32], sizes = [8, 32], strides = [1, 1]} : vector<8x128xf32> to vector<8x32xf32>
    %97 = vector.extract_strided_slice %94 {offsets = [0, 64], sizes = [8, 32], strides = [1, 1]} : vector<8x128xf32> to vector<8x32xf32>
    %98 = vector.extract_strided_slice %94 {offsets = [0, 96], sizes = [8, 32], strides = [1, 1]} : vector<8x128xf32> to vector<8x32xf32>
    %99 = arith.mulf %96, %85 : vector<8x32xf32>
    %100 = arith.mulf %95, %97 : vector<8x32xf32>
    %101 = arith.addf %99, %100 : vector<8x32xf32>
    %102 = math.tanh %101 : vector<8x32xf32>
    %103 = arith.mulf %98, %102 : vector<8x32xf32>
    %104 = vector.extract_strided_slice %23 {offsets = [40, 0], sizes = [8, 128], strides = [1, 1]} : vector<64x128xf32> to vector<8x128xf32>
    %cst_17 = arith.constant dense<0.000000e+00> : vector<8x128xf32>
    %105 = tpu.matmul %103, %17, %cst_17 {dimension_numbers = #tpu.dot_dimension_numbers<[1], [0], [0], [1], [0, 0, 1, 1], [], []>} : vector<8x32xf32>, vector<32x128xf32>, vector<8x128xf32> -> vector<8x128xf32>
    %106 = arith.addf %104, %105 : vector<8x128xf32>
    %107 = arith.mulf %106, %13 : vector<8x128xf32>
    %108 = math.tanh %107 : vector<8x128xf32>
    %109 = arith.mulf %108, %13 : vector<8x128xf32>
    %110 = arith.addf %109, %15 : vector<8x128xf32>
    %111 = vector.extract_strided_slice %110 {offsets = [0, 0], sizes = [8, 32], strides = [1, 1]} : vector<8x128xf32> to vector<8x32xf32>
    %112 = vector.extract_strided_slice %110 {offsets = [0, 32], sizes = [8, 32], strides = [1, 1]} : vector<8x128xf32> to vector<8x32xf32>
    %113 = vector.extract_strided_slice %110 {offsets = [0, 64], sizes = [8, 32], strides = [1, 1]} : vector<8x128xf32> to vector<8x32xf32>
    %114 = vector.extract_strided_slice %110 {offsets = [0, 96], sizes = [8, 32], strides = [1, 1]} : vector<8x128xf32> to vector<8x32xf32>
    %115 = arith.mulf %112, %101 : vector<8x32xf32>
    %116 = arith.mulf %111, %113 : vector<8x32xf32>
    %117 = arith.addf %115, %116 : vector<8x32xf32>
    %118 = math.tanh %117 : vector<8x32xf32>
    %119 = arith.mulf %114, %118 : vector<8x32xf32>
    %120 = vector.extract_strided_slice %23 {offsets = [48, 0], sizes = [8, 128], strides = [1, 1]} : vector<64x128xf32> to vector<8x128xf32>
    %cst_18 = arith.constant dense<0.000000e+00> : vector<8x128xf32>
    %121 = tpu.matmul %119, %17, %cst_18 {dimension_numbers = #tpu.dot_dimension_numbers<[1], [0], [0], [1], [0, 0, 1, 1], [], []>} : vector<8x32xf32>, vector<32x128xf32>, vector<8x128xf32> -> vector<8x128xf32>
    %122 = arith.addf %120, %121 : vector<8x128xf32>
    %123 = arith.mulf %122, %13 : vector<8x128xf32>
    %124 = math.tanh %123 : vector<8x128xf32>
    %125 = arith.mulf %124, %13 : vector<8x128xf32>
    %126 = arith.addf %125, %15 : vector<8x128xf32>
    %127 = vector.extract_strided_slice %126 {offsets = [0, 0], sizes = [8, 32], strides = [1, 1]} : vector<8x128xf32> to vector<8x32xf32>
    %128 = vector.extract_strided_slice %126 {offsets = [0, 32], sizes = [8, 32], strides = [1, 1]} : vector<8x128xf32> to vector<8x32xf32>
    %129 = vector.extract_strided_slice %126 {offsets = [0, 64], sizes = [8, 32], strides = [1, 1]} : vector<8x128xf32> to vector<8x32xf32>
    %130 = vector.extract_strided_slice %126 {offsets = [0, 96], sizes = [8, 32], strides = [1, 1]} : vector<8x128xf32> to vector<8x32xf32>
    %131 = arith.mulf %128, %117 : vector<8x32xf32>
    %132 = arith.mulf %127, %129 : vector<8x32xf32>
    %133 = arith.addf %131, %132 : vector<8x32xf32>
    %134 = math.tanh %133 : vector<8x32xf32>
    %135 = arith.mulf %130, %134 : vector<8x32xf32>
    %136 = vector.extract_strided_slice %23 {offsets = [56, 0], sizes = [8, 128], strides = [1, 1]} : vector<64x128xf32> to vector<8x128xf32>
    %cst_19 = arith.constant dense<0.000000e+00> : vector<8x128xf32>
    %137 = tpu.matmul %135, %17, %cst_19 {dimension_numbers = #tpu.dot_dimension_numbers<[1], [0], [0], [1], [0, 0, 1, 1], [], []>} : vector<8x32xf32>, vector<32x128xf32>, vector<8x128xf32> -> vector<8x128xf32>
    %138 = arith.addf %136, %137 : vector<8x128xf32>
    %139 = arith.mulf %138, %13 : vector<8x128xf32>
    %140 = math.tanh %139 : vector<8x128xf32>
    %141 = arith.mulf %140, %13 : vector<8x128xf32>
    %142 = arith.addf %141, %15 : vector<8x128xf32>
    %143 = vector.extract_strided_slice %142 {offsets = [0, 0], sizes = [8, 32], strides = [1, 1]} : vector<8x128xf32> to vector<8x32xf32>
    %144 = vector.extract_strided_slice %142 {offsets = [0, 32], sizes = [8, 32], strides = [1, 1]} : vector<8x128xf32> to vector<8x32xf32>
    %145 = vector.extract_strided_slice %142 {offsets = [0, 64], sizes = [8, 32], strides = [1, 1]} : vector<8x128xf32> to vector<8x32xf32>
    %146 = vector.extract_strided_slice %142 {offsets = [0, 96], sizes = [8, 32], strides = [1, 1]} : vector<8x128xf32> to vector<8x32xf32>
    %147 = arith.mulf %144, %133 : vector<8x32xf32>
    %148 = arith.mulf %143, %145 : vector<8x32xf32>
    %149 = arith.addf %147, %148 : vector<8x32xf32>
    %150 = math.tanh %149 : vector<8x32xf32>
    %151 = arith.mulf %146, %150 : vector<8x32xf32>
    %c0_20 = arith.constant 0 : index
    %c0_21 = arith.constant 0 : index
    %152 = vector.load %arg4[%c0_20, %c0_21] : memref<64x128xf32, #tpu.memory_space<vmem>>, vector<64x128xf32>
    %c0_22 = arith.constant 0 : index
    %c0_23 = arith.constant 0 : index
    %153 = vector.load %arg5[%c0_22, %c0_23] : memref<1x128xf32, #tpu.memory_space<vmem>>, vector<1x128xf32>
    %154 = vector.shape_cast %153 : vector<1x128xf32> to vector<1x128xf32>
    %155 = vector.broadcast %154 : vector<1x128xf32> to vector<8x128xf32>
    %156 = tpu.concatenate %39, %16 in 1 : vector<8x32xf32>, vector<8x32xf32> -> vector<8x64xf32>
    %cst_24 = arith.constant dense<0.000000e+00> : vector<8x128xf32>
    %157 = tpu.matmul %156, %152, %cst_24 {dimension_numbers = #tpu.dot_dimension_numbers<[1], [0], [0], [1], [0, 0, 1, 1], [], []>} : vector<8x64xf32>, vector<64x128xf32>, vector<8x128xf32> -> vector<8x128xf32>
    %158 = arith.addf %157, %155 : vector<8x128xf32>
    %159 = arith.mulf %158, %13 : vector<8x128xf32>
    %160 = math.tanh %159 : vector<8x128xf32>
    %161 = arith.mulf %160, %13 : vector<8x128xf32>
    %162 = arith.addf %161, %15 : vector<8x128xf32>
    %163 = vector.extract_strided_slice %162 {offsets = [0, 0], sizes = [8, 32], strides = [1, 1]} : vector<8x128xf32> to vector<8x32xf32>
    %164 = vector.extract_strided_slice %162 {offsets = [0, 32], sizes = [8, 32], strides = [1, 1]} : vector<8x128xf32> to vector<8x32xf32>
    %165 = vector.extract_strided_slice %162 {offsets = [0, 64], sizes = [8, 32], strides = [1, 1]} : vector<8x128xf32> to vector<8x32xf32>
    %166 = vector.extract_strided_slice %162 {offsets = [0, 96], sizes = [8, 32], strides = [1, 1]} : vector<8x128xf32> to vector<8x32xf32>
    %167 = arith.mulf %164, %16 : vector<8x32xf32>
    %168 = arith.mulf %163, %165 : vector<8x32xf32>
    %169 = arith.addf %167, %168 : vector<8x32xf32>
    %170 = math.tanh %169 : vector<8x32xf32>
    %171 = arith.mulf %166, %170 : vector<8x32xf32>
    %172 = tpu.concatenate %55, %171 in 1 : vector<8x32xf32>, vector<8x32xf32> -> vector<8x64xf32>
    %cst_25 = arith.constant dense<0.000000e+00> : vector<8x128xf32>
    %173 = tpu.matmul %172, %152, %cst_25 {dimension_numbers = #tpu.dot_dimension_numbers<[1], [0], [0], [1], [0, 0, 1, 1], [], []>} : vector<8x64xf32>, vector<64x128xf32>, vector<8x128xf32> -> vector<8x128xf32>
    %174 = arith.addf %173, %155 : vector<8x128xf32>
    %175 = arith.mulf %174, %13 : vector<8x128xf32>
    %176 = math.tanh %175 : vector<8x128xf32>
    %177 = arith.mulf %176, %13 : vector<8x128xf32>
    %178 = arith.addf %177, %15 : vector<8x128xf32>
    %179 = vector.extract_strided_slice %178 {offsets = [0, 0], sizes = [8, 32], strides = [1, 1]} : vector<8x128xf32> to vector<8x32xf32>
    %180 = vector.extract_strided_slice %178 {offsets = [0, 32], sizes = [8, 32], strides = [1, 1]} : vector<8x128xf32> to vector<8x32xf32>
    %181 = vector.extract_strided_slice %178 {offsets = [0, 64], sizes = [8, 32], strides = [1, 1]} : vector<8x128xf32> to vector<8x32xf32>
    %182 = vector.extract_strided_slice %178 {offsets = [0, 96], sizes = [8, 32], strides = [1, 1]} : vector<8x128xf32> to vector<8x32xf32>
    %183 = arith.mulf %180, %169 : vector<8x32xf32>
    %184 = arith.mulf %179, %181 : vector<8x32xf32>
    %185 = arith.addf %183, %184 : vector<8x32xf32>
    %186 = math.tanh %185 : vector<8x32xf32>
    %187 = arith.mulf %182, %186 : vector<8x32xf32>
    %188 = tpu.concatenate %71, %187 in 1 : vector<8x32xf32>, vector<8x32xf32> -> vector<8x64xf32>
    %cst_26 = arith.constant dense<0.000000e+00> : vector<8x128xf32>
    %189 = tpu.matmul %188, %152, %cst_26 {dimension_numbers = #tpu.dot_dimension_numbers<[1], [0], [0], [1], [0, 0, 1, 1], [], []>} : vector<8x64xf32>, vector<64x128xf32>, vector<8x128xf32> -> vector<8x128xf32>
    %190 = arith.addf %189, %155 : vector<8x128xf32>
    %191 = arith.mulf %190, %13 : vector<8x128xf32>
    %192 = math.tanh %191 : vector<8x128xf32>
    %193 = arith.mulf %192, %13 : vector<8x128xf32>
    %194 = arith.addf %193, %15 : vector<8x128xf32>
    %195 = vector.extract_strided_slice %194 {offsets = [0, 0], sizes = [8, 32], strides = [1, 1]} : vector<8x128xf32> to vector<8x32xf32>
    %196 = vector.extract_strided_slice %194 {offsets = [0, 32], sizes = [8, 32], strides = [1, 1]} : vector<8x128xf32> to vector<8x32xf32>
    %197 = vector.extract_strided_slice %194 {offsets = [0, 64], sizes = [8, 32], strides = [1, 1]} : vector<8x128xf32> to vector<8x32xf32>
    %198 = vector.extract_strided_slice %194 {offsets = [0, 96], sizes = [8, 32], strides = [1, 1]} : vector<8x128xf32> to vector<8x32xf32>
    %199 = arith.mulf %196, %185 : vector<8x32xf32>
    %200 = arith.mulf %195, %197 : vector<8x32xf32>
    %201 = arith.addf %199, %200 : vector<8x32xf32>
    %202 = math.tanh %201 : vector<8x32xf32>
    %203 = arith.mulf %198, %202 : vector<8x32xf32>
    %204 = tpu.concatenate %87, %203 in 1 : vector<8x32xf32>, vector<8x32xf32> -> vector<8x64xf32>
    %cst_27 = arith.constant dense<0.000000e+00> : vector<8x128xf32>
    %205 = tpu.matmul %204, %152, %cst_27 {dimension_numbers = #tpu.dot_dimension_numbers<[1], [0], [0], [1], [0, 0, 1, 1], [], []>} : vector<8x64xf32>, vector<64x128xf32>, vector<8x128xf32> -> vector<8x128xf32>
    %206 = arith.addf %205, %155 : vector<8x128xf32>
    %207 = arith.mulf %206, %13 : vector<8x128xf32>
    %208 = math.tanh %207 : vector<8x128xf32>
    %209 = arith.mulf %208, %13 : vector<8x128xf32>
    %210 = arith.addf %209, %15 : vector<8x128xf32>
    %211 = vector.extract_strided_slice %210 {offsets = [0, 0], sizes = [8, 32], strides = [1, 1]} : vector<8x128xf32> to vector<8x32xf32>
    %212 = vector.extract_strided_slice %210 {offsets = [0, 32], sizes = [8, 32], strides = [1, 1]} : vector<8x128xf32> to vector<8x32xf32>
    %213 = vector.extract_strided_slice %210 {offsets = [0, 64], sizes = [8, 32], strides = [1, 1]} : vector<8x128xf32> to vector<8x32xf32>
    %214 = vector.extract_strided_slice %210 {offsets = [0, 96], sizes = [8, 32], strides = [1, 1]} : vector<8x128xf32> to vector<8x32xf32>
    %215 = arith.mulf %212, %201 : vector<8x32xf32>
    %216 = arith.mulf %211, %213 : vector<8x32xf32>
    %217 = arith.addf %215, %216 : vector<8x32xf32>
    %218 = math.tanh %217 : vector<8x32xf32>
    %219 = arith.mulf %214, %218 : vector<8x32xf32>
    %220 = tpu.concatenate %103, %219 in 1 : vector<8x32xf32>, vector<8x32xf32> -> vector<8x64xf32>
    %cst_28 = arith.constant dense<0.000000e+00> : vector<8x128xf32>
    %221 = tpu.matmul %220, %152, %cst_28 {dimension_numbers = #tpu.dot_dimension_numbers<[1], [0], [0], [1], [0, 0, 1, 1], [], []>} : vector<8x64xf32>, vector<64x128xf32>, vector<8x128xf32> -> vector<8x128xf32>
    %222 = arith.addf %221, %155 : vector<8x128xf32>
    %223 = arith.mulf %222, %13 : vector<8x128xf32>
    %224 = math.tanh %223 : vector<8x128xf32>
    %225 = arith.mulf %224, %13 : vector<8x128xf32>
    %226 = arith.addf %225, %15 : vector<8x128xf32>
    %227 = vector.extract_strided_slice %226 {offsets = [0, 0], sizes = [8, 32], strides = [1, 1]} : vector<8x128xf32> to vector<8x32xf32>
    %228 = vector.extract_strided_slice %226 {offsets = [0, 32], sizes = [8, 32], strides = [1, 1]} : vector<8x128xf32> to vector<8x32xf32>
    %229 = vector.extract_strided_slice %226 {offsets = [0, 64], sizes = [8, 32], strides = [1, 1]} : vector<8x128xf32> to vector<8x32xf32>
    %230 = vector.extract_strided_slice %226 {offsets = [0, 96], sizes = [8, 32], strides = [1, 1]} : vector<8x128xf32> to vector<8x32xf32>
    %231 = arith.mulf %228, %217 : vector<8x32xf32>
    %232 = arith.mulf %227, %229 : vector<8x32xf32>
    %233 = arith.addf %231, %232 : vector<8x32xf32>
    %234 = math.tanh %233 : vector<8x32xf32>
    %235 = arith.mulf %230, %234 : vector<8x32xf32>
    %236 = tpu.concatenate %119, %235 in 1 : vector<8x32xf32>, vector<8x32xf32> -> vector<8x64xf32>
    %cst_29 = arith.constant dense<0.000000e+00> : vector<8x128xf32>
    %237 = tpu.matmul %236, %152, %cst_29 {dimension_numbers = #tpu.dot_dimension_numbers<[1], [0], [0], [1], [0, 0, 1, 1], [], []>} : vector<8x64xf32>, vector<64x128xf32>, vector<8x128xf32> -> vector<8x128xf32>
    %238 = arith.addf %237, %155 : vector<8x128xf32>
    %239 = arith.mulf %238, %13 : vector<8x128xf32>
    %240 = math.tanh %239 : vector<8x128xf32>
    %241 = arith.mulf %240, %13 : vector<8x128xf32>
    %242 = arith.addf %241, %15 : vector<8x128xf32>
    %243 = vector.extract_strided_slice %242 {offsets = [0, 0], sizes = [8, 32], strides = [1, 1]} : vector<8x128xf32> to vector<8x32xf32>
    %244 = vector.extract_strided_slice %242 {offsets = [0, 32], sizes = [8, 32], strides = [1, 1]} : vector<8x128xf32> to vector<8x32xf32>
    %245 = vector.extract_strided_slice %242 {offsets = [0, 64], sizes = [8, 32], strides = [1, 1]} : vector<8x128xf32> to vector<8x32xf32>
    %246 = vector.extract_strided_slice %242 {offsets = [0, 96], sizes = [8, 32], strides = [1, 1]} : vector<8x128xf32> to vector<8x32xf32>
    %247 = arith.mulf %244, %233 : vector<8x32xf32>
    %248 = arith.mulf %243, %245 : vector<8x32xf32>
    %249 = arith.addf %247, %248 : vector<8x32xf32>
    %250 = math.tanh %249 : vector<8x32xf32>
    %251 = arith.mulf %246, %250 : vector<8x32xf32>
    %252 = tpu.concatenate %135, %251 in 1 : vector<8x32xf32>, vector<8x32xf32> -> vector<8x64xf32>
    %cst_30 = arith.constant dense<0.000000e+00> : vector<8x128xf32>
    %253 = tpu.matmul %252, %152, %cst_30 {dimension_numbers = #tpu.dot_dimension_numbers<[1], [0], [0], [1], [0, 0, 1, 1], [], []>} : vector<8x64xf32>, vector<64x128xf32>, vector<8x128xf32> -> vector<8x128xf32>
    %254 = arith.addf %253, %155 : vector<8x128xf32>
    %255 = arith.mulf %254, %13 : vector<8x128xf32>
    %256 = math.tanh %255 : vector<8x128xf32>
    %257 = arith.mulf %256, %13 : vector<8x128xf32>
    %258 = arith.addf %257, %15 : vector<8x128xf32>
    %259 = vector.extract_strided_slice %258 {offsets = [0, 0], sizes = [8, 32], strides = [1, 1]} : vector<8x128xf32> to vector<8x32xf32>
    %260 = vector.extract_strided_slice %258 {offsets = [0, 32], sizes = [8, 32], strides = [1, 1]} : vector<8x128xf32> to vector<8x32xf32>
    %261 = vector.extract_strided_slice %258 {offsets = [0, 64], sizes = [8, 32], strides = [1, 1]} : vector<8x128xf32> to vector<8x32xf32>
    %262 = vector.extract_strided_slice %258 {offsets = [0, 96], sizes = [8, 32], strides = [1, 1]} : vector<8x128xf32> to vector<8x32xf32>
    %263 = arith.mulf %260, %249 : vector<8x32xf32>
    %264 = arith.mulf %259, %261 : vector<8x32xf32>
    %265 = arith.addf %263, %264 : vector<8x32xf32>
    %266 = math.tanh %265 : vector<8x32xf32>
    %267 = arith.mulf %262, %266 : vector<8x32xf32>
    %268 = tpu.concatenate %151, %267 in 1 : vector<8x32xf32>, vector<8x32xf32> -> vector<8x64xf32>
    %cst_31 = arith.constant dense<0.000000e+00> : vector<8x128xf32>
    %269 = tpu.matmul %268, %152, %cst_31 {dimension_numbers = #tpu.dot_dimension_numbers<[1], [0], [0], [1], [0, 0, 1, 1], [], []>} : vector<8x64xf32>, vector<64x128xf32>, vector<8x128xf32> -> vector<8x128xf32>
    %270 = arith.addf %269, %155 : vector<8x128xf32>
    %271 = arith.mulf %270, %13 : vector<8x128xf32>
    %272 = math.tanh %271 : vector<8x128xf32>
    %273 = arith.mulf %272, %13 : vector<8x128xf32>
    %274 = arith.addf %273, %15 : vector<8x128xf32>
    %275 = vector.extract_strided_slice %274 {offsets = [0, 0], sizes = [8, 32], strides = [1, 1]} : vector<8x128xf32> to vector<8x32xf32>
    %276 = vector.extract_strided_slice %274 {offsets = [0, 32], sizes = [8, 32], strides = [1, 1]} : vector<8x128xf32> to vector<8x32xf32>
    %277 = vector.extract_strided_slice %274 {offsets = [0, 64], sizes = [8, 32], strides = [1, 1]} : vector<8x128xf32> to vector<8x32xf32>
    %278 = vector.extract_strided_slice %274 {offsets = [0, 96], sizes = [8, 32], strides = [1, 1]} : vector<8x128xf32> to vector<8x32xf32>
    %279 = arith.mulf %276, %265 : vector<8x32xf32>
    %280 = arith.mulf %275, %277 : vector<8x32xf32>
    %281 = arith.addf %279, %280 : vector<8x32xf32>
    %282 = math.tanh %281 : vector<8x32xf32>
    %283 = arith.mulf %278, %282 : vector<8x32xf32>
    %c0_32 = arith.constant 0 : index
    %c0_33 = arith.constant 0 : index
    %284 = vector.load %arg6[%c0_32, %c0_33] : memref<32x4xf32, #tpu.memory_space<vmem>>, vector<32x4xf32>
    %cst_34 = arith.constant dense<0.000000e+00> : vector<8x4xf32>
    %285 = tpu.matmul %283, %284, %cst_34 {dimension_numbers = #tpu.dot_dimension_numbers<[1], [0], [0], [1], [0, 0, 1, 1], [], []>} : vector<8x32xf32>, vector<32x4xf32>, vector<8x4xf32> -> vector<8x4xf32>
    %c0_35 = arith.constant 0 : index
    %c0_36 = arith.constant 0 : index
    %286 = vector.load %arg7[%c0_35, %c0_36] : memref<1x4xf32, #tpu.memory_space<vmem>>, vector<1x4xf32>
    %287 = vector.broadcast %286 : vector<1x4xf32> to vector<8x4xf32>
    %288 = arith.addf %285, %287 : vector<8x4xf32>
    %c0_37 = arith.constant 0 : index
    %c0_38 = arith.constant 0 : index
    %289 = vector.load %arg8[%c0_37, %c0_38] : memref<8x4xf32, #tpu.memory_space<vmem>>, vector<8x4xf32>
    tpu.vector_store %arg8[%c0_37, %c0_38], %288 {strides = array<i32>} : memref<8x4xf32, #tpu.memory_space<vmem>>, vector<8x4xf32>,
    return
  }
}

</mosaic_0001>

<llo_original>
// kernel: lstm_model_forward.1
$region0: #{lstm_model_forward.1}
  #allocation0 [shape = 'u32[]', space=smem, size = 0x4, offset = 0x4, fixed_abs, tag = 'smem constant byte address 0x4 - core index']
  #allocation1 [shape = 'u32[144,128]{1,0:T(1,128)}', space=vmem, size = 0x12000, scoped, tag = 'internal scratch']
  %s0 = inlined_call_operand.vmem [shape: f32[64,8], index: 0, kind: input, shape index: {}]
  %s1 = inlined_call_operand.vmem [shape: f32[8,128], index: 1, kind: input, shape index: {}]
  %s2 = inlined_call_operand.vmem [shape: f32[32,128], index: 2, kind: input, shape index: {}]
  %s3 = inlined_call_operand.vmem [shape: f32[1,128], index: 3, kind: input, shape index: {}]
  %s4 = inlined_call_operand.vmem [shape: f32[64,128], index: 4, kind: input, shape index: {}]
  %s5 = inlined_call_operand.vmem [shape: f32[1,128], index: 5, kind: input, shape index: {}]
  %s6 = inlined_call_operand.vmem [shape: f32[32,4], index: 6, kind: input, shape index: {}]
  %s7 = inlined_call_operand.vmem [shape: f32[1,4], index: 7, kind: input, shape index: {}]
  %s8 = inlined_call_operand.vmem [shape: f32[8,4], index: 8, kind: output, shape index: {}]
  %s9 = sld [smem:[#allocation0]]
  $region42: #{lstm_model_forward.1} parent=0
    _
  %s11 = ssub.s32 1, %s9
  %s12 = scalar_select 0, %s11, %s9
  // Predicated region
  $region2: #{lstm_model_forward.1} parent=0 // pred_check
    _
  $region3: #{lstm_model_forward.1} parent=0 // pred_check_branch
    %14 = sbr.rel (0) target = $region5
  $region4: #{lstm_model_forward.1} parent=0 // pred_region
    _
  $region5: #{lstm_model_forward.1} parent=0 // pred_fallthru
    _
  // Predicated region
  $region6: #{lstm_model_forward.1} parent=0 // pred_check
    _
  $region7: #{lstm_model_forward.1} parent=0 // pred_check_branch
    %16 = sbr.rel (0) target = $region9
  $region8: #{lstm_model_forward.1} parent=0 // pred_region
    _
  $region9: #{lstm_model_forward.1} parent=0 // pred_fallthru
    _
  // Predicated region
  $region10: #{lstm_model_forward.1} parent=0 // pred_check
    _
  $region11: #{lstm_model_forward.1} parent=0 // pred_check_branch
    %18 = sbr.rel (0) target = $region13
  $region12: #{lstm_model_forward.1} parent=0 // pred_region
    _
  $region13: #{lstm_model_forward.1} parent=0 // pred_fallthru
    _
  // Predicated region
  $region14: #{lstm_model_forward.1} parent=0 // pred_check
    _
  $region15: #{lstm_model_forward.1} parent=0 // pred_check_branch
    %20 = sbr.rel (0) target = $region17
  $region16: #{lstm_model_forward.1} parent=0 // pred_region
    _
  $region17: #{lstm_model_forward.1} parent=0 // pred_fallthru
    _
  // Predicated region
  $region18: #{lstm_model_forward.1} parent=0 // pred_check
    _
  $region19: #{lstm_model_forward.1} parent=0 // pred_check_branch
    %22 = sbr.rel (0) target = $region21
  $region20: #{lstm_model_forward.1} parent=0 // pred_region
    _
  $region21: #{lstm_model_forward.1} parent=0 // pred_fallthru
    _
  // Predicated region
  $region22: #{lstm_model_forward.1} parent=0 // pred_check
    _
  $region23: #{lstm_model_forward.1} parent=0 // pred_check_branch
    %24 = sbr.rel (0) target = $region25
  $region24: #{lstm_model_forward.1} parent=0 // pred_region
    _
  $region25: #{lstm_model_forward.1} parent=0 // pred_fallthru
    _
  // Predicated region
  $region26: #{lstm_model_forward.1} parent=0 // pred_check
    _
  $region27: #{lstm_model_forward.1} parent=0 // pred_check_branch
    %26 = sbr.rel (0) target = $region29
  $region28: #{lstm_model_forward.1} parent=0 // pred_region
    _
  $region29: #{lstm_model_forward.1} parent=0 // pred_fallthru
    _
  // Predicated region
  $region30: #{lstm_model_forward.1} parent=0 // pred_check
    _
  $region31: #{lstm_model_forward.1} parent=0 // pred_check_branch
    %28 = sbr.rel (0) target = $region33
  $region32: #{lstm_model_forward.1} parent=0 // pred_region
    _
  $region33: #{lstm_model_forward.1} parent=0 // pred_fallthru
    _
  %v29 = vlaneseq
  %v30 = vand.u32 %v29, 127
  %vm31 = vcmp.ge.s32.totalorder %v30, 64
  %vm32 = vcmp.lt.s32.totalorder %v30, 96
  %vm33 = vmand %vm31, %vm32
  %v34 = vsel %vm33, 1.0, 0.5
  %v35 = vsel %vm33, 0.0, 0.5
  %v36 = vld [vmem:[%s2] sm:$0xff]
  %v37 = vld [vmem:[%s2 + $0x8] sm:$0xff]
  %v38 = vld [vmem:[%s2 + $0x10] sm:$0xff]
  %v39 = vld [vmem:[%s2 + $0x18] sm:$0xff]
  %v40 = vld [vmem:[%s0] sm:$0xff]
  %v41 = vld [vmem:[%s0 + $0x8] sm:$0xff]
  %v42 = vld [vmem:[%s0 + $0x10] sm:$0xff]
  %v43 = vld [vmem:[%s0 + $0x18] sm:$0xff]
  %v44 = vld [vmem:[%s0 + $0x20] sm:$0xff]
  %v45 = vld [vmem:[%s0 + $0x28] sm:$0xff]
  %v46 = vld [vmem:[%s0 + $0x30] sm:$0xff]
  %v47 = vld [vmem:[%s0 + $0x38] sm:$0xff]
  %v48 = vld [vmem:[%s1] sm:$0xff]
  %v49 = vld [vmem:[%s3] sm:$0x1]
  %v51 = vlaneseq
  %v52 = vshrl.u32 %v51, 7
  %v53 = vsub.s32 0, %v52
  %v54 = vrot.slane %v49, %v53
  %vm56 = vcmask 64512
  %v58 = vsel %vm56, %v40, 0
  %v61 = vsel %vm56, %v41, 0
  %v64 = vsel %vm56, %v42, 0
  %v67 = vsel %vm56, %v43, 0
  %v70 = vsel %vm56, %v44, 0
  %v73 = vsel %vm56, %v45, 0
  %v76 = vsel %vm56, %v46, 0
  %v79 = vsel %vm56, %v47, 0
  %81 = vmatprep.subr.mxu0 0.0
  %82 = vmatpush1.msra.mxu0 0.0
  %83 = vmatprep.subr.mxu0 0.0
  %84 = vmatpush1.msra.mxu0 0.0
  %85 = vmatprep.subr.mxu0 0.0
  %86 = vmatpush1.msra.mxu0 0.0
  %87 = vmatprep.subr.mxu0 0.0
  %88 = vmatpush1.msra.mxu0 0.0
  %89 = vmatprep.subr.mxu0 0.0
  %90 = vmatpush1.msra.mxu0 0.0
  %91 = vmatprep.subr.mxu0 0.0
  %92 = vmatpush1.msra.mxu0 0.0
  %93 = vmatprep.subr.mxu0 0.0
  %94 = vmatpush1.msra.mxu0 0.0
  %95 = vmatprep.subr.mxu0 0.0
  %96 = vmatpush1.msra.mxu0 0.0
  %97 = vmatprep.subr.mxu0 0.0
  %98 = vmatpush1.msra.mxu0 0.0
  %99 = vmatprep.subr.mxu0 0.0
  %100 = vmatpush1.msra.mxu0 0.0
  %101 = vmatprep.subr.mxu0 0.0
  %102 = vmatpush1.msra.mxu0 0.0
  %103 = vmatprep.subr.mxu0 0.0
  %104 = vmatpush1.msra.mxu0 0.0
  %105 = vmatprep.subr.mxu0 0.0
  %106 = vmatpush1.msra.mxu0 0.0
  %107 = vmatprep.subr.mxu0 0.0
  %108 = vmatpush1.msra.mxu0 0.0
  %109 = vmatprep.subr.mxu0 0.0
  %110 = vmatpush1.msra.mxu0 0.0
  %111 = vmatprep.subr.mxu0 0.0
  %112 = vmatpush1.msra.mxu0 %v48
  %113 = vmatprep.subr.mxu0 0.0
  %114 = vmatpush2.msra.mxu0 0.0
  %115 = vmatprep.subr.mxu0 0.0
  %116 = vmatpush2.msra.mxu0 0.0
  %117 = vmatprep.subr.mxu0 0.0
  %118 = vmatpush2.msra.mxu0 0.0
  %119 = vmatprep.subr.mxu0 0.0
  %120 = vmatpush2.msra.mxu0 0.0
  %121 = vmatprep.subr.mxu0 0.0
  %122 = vmatpush2.msra.mxu0 0.0
  %123 = vmatprep.subr.mxu0 0.0
  %124 = vmatpush2.msra.mxu0 0.0
  %125 = vmatprep.subr.mxu0 0.0
  %126 = vmatpush2.msra.mxu0 0.0
  %127 = vmatprep.subr.mxu0 0.0
  %128 = vmatpush2.msra.mxu0 0.0
  %129 = vmatprep.subr.mxu0 0.0
  %130 = vmatpush2.msra.mxu0 0.0
  %131 = vmatprep.subr.mxu0 0.0
  %132 = vmatpush2.msra.mxu0 0.0
  %133 = vmatprep.subr.mxu0 0.0
  %134 = vmatpush2.msra.mxu0 0.0
  %135 = vmatprep.subr.mxu0 0.0
  %136 = vmatpush2.msra.mxu0 0.0
  %137 = vmatprep.subr.mxu0 0.0
  %138 = vmatpush2.msra.mxu0 0.0
  %139 = vmatprep.subr.mxu0 0.0
  %140 = vmatpush2.msra.mxu0 0.0
  %141 = vmatprep.subr.mxu0 0.0
  %142 = vmatpush2.msra.mxu0 0.0
  %143 = vmatprep.subr.mxu0 0.0
  %144 = vmatpush2.msra.mxu0 0.0
  %145 = vmatprep.mubr.f32.mxu0 0.0
  %146 = vmatmul.mubr.f32.gmra.mxu0 %v58
  %v147 = vpop.f32.mrf.mxu0
  %v148 = vadd.f32 %v54, %v147
  %v149 = vpop.f32.mrf.mxu0
  %150 = vmatprep.mubr.f32.mxu0 0.0
  %151 = vmatmul.mubr.f32.gmra.mxu0 %v61
  %v152 = vpop.f32.mrf.mxu0
  %v153 = vadd.f32 %v54, %v152
  %v154 = vpop.f32.mrf.mxu0
  %155 = vmatprep.mubr.f32.mxu0 0.0
  %156 = vmatmul.mubr.f32.gmra.mxu0 %v64
  %v157 = vpop.f32.mrf.mxu0
  %v158 = vadd.f32 %v54, %v157
  %v159 = vpop.f32.mrf.mxu0
  %160 = vmatprep.mubr.f32.mxu0 0.0
  %161 = vmatmul.mubr.f32.gmra.mxu0 %v67
  %v162 = vpop.f32.mrf.mxu0
  %v163 = vadd.f32 %v54, %v162
  %v164 = vpop.f32.mrf.mxu0
  %165 = vmatprep.mubr.f32.mxu0 0.0
  %166 = vmatmul.mubr.f32.gmra.mxu0 %v70
  %v167 = vpop.f32.mrf.mxu0
  %v168 = vadd.f32 %v54, %v167
  %v169 = vpop.f32.mrf.mxu0
  %170 = vmatprep.mubr.f32.mxu0 0.0
  %171 = vmatmul.mubr.f32.gmra.mxu0 %v73
  %v172 = vpop.f32.mrf.mxu0
  %v173 = vadd.f32 %v54, %v172
  %v174 = vpop.f32.mrf.mxu0
  %175 = vmatprep.mubr.f32.mxu0 0.0
  %176 = vmatmul.mubr.f32.gmra.mxu0 %v76
  %v177 = vpop.f32.mrf.mxu0
  %v178 = vadd.f32 %v54, %v177
  %v179 = vpop.f32.mrf.mxu0
  %180 = vmatprep.mubr.f32.mxu0 0.0
  %181 = vmatmul.mubr.f32.gmra.mxu0 %v79
  %v182 = vpop.f32.mrf.mxu0
  %v183 = vadd.f32 %v54, %v182
  %v184 = vpop.f32.mrf.mxu0
  %185 = vdwg.mxu0
  %vm186 = vcmask 261120
  %v188 = vsel %vm186, 0.0, 0
  %190 = vmatprep.subr.mxu0 0.0
  %191 = vmatpush1.msra.mxu0 0.0
  %192 = vmatprep.subr.mxu0 0.0
  %193 = vmatpush1.msra.mxu0 0.0
  %194 = vmatprep.subr.mxu0 0.0
  %195 = vmatpush1.msra.mxu0 0.0
  %196 = vmatprep.subr.mxu0 0.0
  %197 = vmatpush1.msra.mxu0 0.0
  %198 = vmatprep.subr.mxu0 0.0
  %199 = vmatpush1.msra.mxu0 0.0
  %200 = vmatprep.subr.mxu0 0.0
  %201 = vmatpush1.msra.mxu0 0.0
  %202 = vmatprep.subr.mxu0 0.0
  %203 = vmatpush1.msra.mxu0 0.0
  %204 = vmatprep.subr.mxu0 0.0
  %205 = vmatpush1.msra.mxu0 0.0
  %206 = vmatprep.subr.mxu0 0.0
  %207 = vmatpush1.msra.mxu0 0.0
  %208 = vmatprep.subr.mxu0 0.0
  %209 = vmatpush1.msra.mxu0 0.0
  %210 = vmatprep.subr.mxu0 0.0
  %211 = vmatpush1.msra.mxu0 0.0
  %212 = vmatprep.subr.mxu0 0.0
  %213 = vmatpush1.msra.mxu0 0.0
  %214 = vmatprep.subr.mxu0 0.0
  %215 = vmatpush1.msra.mxu0 %v39
  %216 = vmatprep.subr.mxu0 0.0
  %217 = vmatpush1.msra.mxu0 %v38
  %218 = vmatprep.subr.mxu0 0.0
  %219 = vmatpush1.msra.mxu0 %v37
  %220 = vmatprep.subr.mxu0 0.0
  %221 = vmatpush1.msra.mxu0 %v36
  %222 = vmatprep.subr.mxu0 0.0
  %223 = vmatpush2.msra.mxu0 0.0
  %224 = vmatprep.subr.mxu0 0.0
  %225 = vmatpush2.msra.mxu0 0.0
  %226 = vmatprep.subr.mxu0 0.0
  %227 = vmatpush2.msra.mxu0 0.0
  %228 = vmatprep.subr.mxu0 0.0
  %229 = vmatpush2.msra.mxu0 0.0
  %230 = vmatprep.subr.mxu0 0.0
  %231 = vmatpush2.msra.mxu0 0.0
  %232 = vmatprep.subr.mxu0 0.0
  %233 = vmatpush2.msra.mxu0 0.0
  %234 = vmatprep.subr.mxu0 0.0
  %235 = vmatpush2.msra.mxu0 0.0
  %236 = vmatprep.subr.mxu0 0.0
  %237 = vmatpush2.msra.mxu0 0.0
  %238 = vmatprep.subr.mxu0 0.0
  %239 = vmatpush2.msra.mxu0 0.0
  %240 = vmatprep.subr.mxu0 0.0
  %241 = vmatpush2.msra.mxu0 0.0
  %242 = vmatprep.subr.mxu0 0.0
  %243 = vmatpush2.msra.mxu0 0.0
  %244 = vmatprep.subr.mxu0 0.0
  %245 = vmatpush2.msra.mxu0 0.0
  %246 = vmatprep.subr.mxu0 0.0
  %247 = vmatpush2.msra.mxu0 0.0
  %248 = vmatprep.subr.mxu0 0.0
  %249 = vmatpush2.msra.mxu0 0.0
  %250 = vmatprep.subr.mxu0 0.0
  %251 = vmatpush2.msra.mxu0 0.0
  %252 = vmatprep.subr.mxu0 0.0
  %253 = vmatpush2.msra.mxu0 0.0
  %254 = vmatprep.mubr.f32.mxu0 0.0
  %255 = vmatmul.mubr.f32.gmra.mxu0 %v188
  %v256 = vpop.f32.mrf.mxu0
  %v257 = vadd.f32 0.0, %v256
  %v258 = vpop.f32.mrf.mxu0
  %259 = vdwg.mxu0
  %v260 = vadd.f32 %v148, %v257
  %v261 = vmul.f32 %v260, %v34
  %v262 = vtanh.pop %v261
  %v263 = vmul.f32 %v262, %v34
  %v264 = vadd.f32 %v263, %v35
  %v265 = vmul.f32 %v264, 0.0
  %267 = vrot.lane.b32.xlu0 %v264, 64
  %v268 = vpop.permute.xlu0 %267
  %v270 = vmul.f32 %v264, %v268
  %272 = vrot.lane.b32.xlu0 %v270, 32
  %v273 = vpop.permute.xlu0 %272
  %v275 = vadd.f32 %v265, %v273
  %v276 = vtanh.pop %v275
  %278 = vrot.lane.b32.xlu0 %v276, 64
  %v279 = vpop.permute.xlu0 %278
  %v281 = vmul.f32 %v264, %v279
  %283 = vrot.lane.b32.xlu0 %v281, 32
  %v284 = vpop.permute.xlu0 %283
  %v285 = vsel %vm186, %v284, 0
  %287 = vmatprep.subr.mxu0 0.0
  %288 = vmatpush1.msra.mxu0 0.0
  %289 = vmatprep.subr.mxu0 0.0
  %290 = vmatpush1.msra.mxu0 0.0
  %291 = vmatprep.subr.mxu0 0.0
  %292 = vmatpush1.msra.mxu0 0.0
  %293 = vmatprep.subr.mxu0 0.0
  %294 = vmatpush1.msra.mxu0 0.0
  %295 = vmatprep.subr.mxu0 0.0
  %296 = vmatpush1.msra.mxu0 0.0
  %297 = vmatprep.subr.mxu0 0.0
  %298 = vmatpush1.msra.mxu0 0.0
  %299 = vmatprep.subr.mxu0 0.0
  %300 = vmatpush1.msra.mxu0 0.0
  %301 = vmatprep.subr.mxu0 0.0
  %302 = vmatpush1.msra.mxu0 0.0
  %303 = vmatprep.subr.mxu0 0.0
  %304 = vmatpush1.msra.mxu0 0.0
  %305 = vmatprep.subr.mxu0 0.0
  %306 = vmatpush1.msra.mxu0 0.0
  %307 = vmatprep.subr.mxu0 0.0
  %308 = vmatpush1.msra.mxu0 0.0
  %309 = vmatprep.subr.mxu0 0.0
  %310 = vmatpush1.msra.mxu0 0.0
  %311 = vmatprep.subr.mxu0 0.0
  %312 = vmatpush1.msra.mxu0 %v39
  %313 = vmatprep.subr.mxu0 0.0
  %314 = vmatpush1.msra.mxu0 %v38
  %315 = vmatprep.subr.mxu0 0.0
  %316 = vmatpush1.msra.mxu0 %v37
  %317 = vmatprep.subr.mxu0 0.0
  %318 = vmatpush1.msra.mxu0 %v36
  %319 = vmatprep.subr.mxu0 0.0
  %320 = vmatpush2.msra.mxu0 0.0
  %321 = vmatprep.subr.mxu0 0.0
  %322 = vmatpush2.msra.mxu0 0.0
  %323 = vmatprep.subr.mxu0 0.0
  %324 = vmatpush2.msra.mxu0 0.0
  %325 = vmatprep.subr.mxu0 0.0
  %326 = vmatpush2.msra.mxu0 0.0
  %327 = vmatprep.subr.mxu0 0.0
  %328 = vmatpush2.msra.mxu0 0.0
  %329 = vmatprep.subr.mxu0 0.0
  %330 = vmatpush2.msra.mxu0 0.0
  %331 = vmatprep.subr.mxu0 0.0
  %332 = vmatpush2.msra.mxu0 0.0
  %333 = vmatprep.subr.mxu0 0.0
  %334 = vmatpush2.msra.mxu0 0.0
  %335 = vmatprep.subr.mxu0 0.0
  %336 = vmatpush2.msra.mxu0 0.0
  %337 = vmatprep.subr.mxu0 0.0
  %338 = vmatpush2.msra.mxu0 0.0
  %339 = vmatprep.subr.mxu0 0.0
  %340 = vmatpush2.msra.mxu0 0.0
  %341 = vmatprep.subr.mxu0 0.0
  %342 = vmatpush2.msra.mxu0 0.0
  %343 = vmatprep.subr.mxu0 0.0
  %344 = vmatpush2.msra.mxu0 0.0
  %345 = vmatprep.subr.mxu0 0.0
  %346 = vmatpush2.msra.mxu0 0.0
  %347 = vmatprep.subr.mxu0 0.0
  %348 = vmatpush2.msra.mxu0 0.0
  %349 = vmatprep.subr.mxu0 0.0
  %350 = vmatpush2.msra.mxu0 0.0
  %351 = vmatprep.mubr.f32.mxu0 0.0
  %352 = vmatmul.mubr.f32.gmra.mxu0 %v285
  %v353 = vpop.f32.mrf.mxu0
  %v354 = vadd.f32 0.0, %v353
  %v355 = vpop.f32.mrf.mxu0
  %356 = vdwg.mxu0
  %v357 = vadd.f32 %v153, %v354
  %v358 = vmul.f32 %v357, %v34
  %v359 = vtanh.pop %v358
  %v360 = vmul.f32 %v359, %v34
  %v361 = vadd.f32 %v360, %v35
  %v362 = vmul.f32 %v361, %v275
  %364 = vrot.lane.b32.xlu0 %v361, 64
  %v365 = vpop.permute.xlu0 %364
  %v367 = vmul.f32 %v361, %v365
  %369 = vrot.lane.b32.xlu0 %v367, 32
  %v370 = vpop.permute.xlu0 %369
  %v372 = vadd.f32 %v362, %v370
  %v373 = vtanh.pop %v372
  %375 = vrot.lane.b32.xlu0 %v373, 64
  %v376 = vpop.permute.xlu0 %375
  %v378 = vmul.f32 %v361, %v376
  %380 = vrot.lane.b32.xlu0 %v378, 32
  %v381 = vpop.permute.xlu0 %380
  %v382 = vsel %vm186, %v381, 0
  %384 = vmatprep.subr.mxu0 0.0
  %385 = vmatpush1.msra.mxu0 0.0
  %386 = vmatprep.subr.mxu0 0.0
  %387 = vmatpush1.msra.mxu0 0.0
  %388 = vmatprep.subr.mxu0 0.0
  %389 = vmatpush1.msra.mxu0 0.0
  %390 = vmatprep.subr.mxu0 0.0
  %391 = vmatpush1.msra.mxu0 0.0
  %392 = vmatprep.subr.mxu0 0.0
  %393 = vmatpush1.msra.mxu0 0.0
  %394 = vmatprep.subr.mxu0 0.0
  %395 = vmatpush1.msra.mxu0 0.0
  %396 = vmatprep.subr.mxu0 0.0
  %397 = vmatpush1.msra.mxu0 0.0
  %398 = vmatprep.subr.mxu0 0.0
  %399 = vmatpush1.msra.mxu0 0.0
  %400 = vmatprep.subr.mxu0 0.0
  %401 = vmatpush1.msra.mxu0 0.0
  %402 = vmatprep.subr.mxu0 0.0
  %403 = vmatpush1.msra.mxu0 0.0
  %404 = vmatprep.subr.mxu0 0.0
  %405 = vmatpush1.msra.mxu0 0.0
  %406 = vmatprep.subr.mxu0 0.0
  %407 = vmatpush1.msra.mxu0 0.0
  %408 = vmatprep.subr.mxu0 0.0
  %409 = vmatpush1.msra.mxu0 %v39
  %410 = vmatprep.subr.mxu0 0.0
  %411 = vmatpush1.msra.mxu0 %v38
  %412 = vmatprep.subr.mxu0 0.0
  %413 = vmatpush1.msra.mxu0 %v37
  %414 = vmatprep.subr.mxu0 0.0
  %415 = vmatpush1.msra.mxu0 %v36
  %416 = vmatprep.subr.mxu0 0.0
  %417 = vmatpush2.msra.mxu0 0.0
  %418 = vmatprep.subr.mxu0 0.0
  %419 = vmatpush2.msra.mxu0 0.0
  %420 = vmatprep.subr.mxu0 0.0
  %421 = vmatpush2.msra.mxu0 0.0
  %422 = vmatprep.subr.mxu0 0.0
  %423 = vmatpush2.msra.mxu0 0.0
  %424 = vmatprep.subr.mxu0 0.0
  %425 = vmatpush2.msra.mxu0 0.0
  %426 = vmatprep.subr.mxu0 0.0
  %427 = vmatpush2.msra.mxu0 0.0
  %428 = vmatprep.subr.mxu0 0.0
  %429 = vmatpush2.msra.mxu0 0.0
  %430 = vmatprep.subr.mxu0 0.0
  %431 = vmatpush2.msra.mxu0 0.0
  %432 = vmatprep.subr.mxu0 0.0
  %433 = vmatpush2.msra.mxu0 0.0
  %434 = vmatprep.subr.mxu0 0.0
  %435 = vmatpush2.msra.mxu0 0.0
  %436 = vmatprep.subr.mxu0 0.0
  %437 = vmatpush2.msra.mxu0 0.0
  %438 = vmatprep.subr.mxu0 0.0
  %439 = vmatpush2.msra.mxu0 0.0
  %440 = vmatprep.subr.mxu0 0.0
  %441 = vmatpush2.msra.mxu0 0.0
  %442 = vmatprep.subr.mxu0 0.0
  %443 = vmatpush2.msra.mxu0 0.0
  %444 = vmatprep.subr.mxu0 0.0
  %445 = vmatpush2.msra.mxu0 0.0
  %446 = vmatprep.subr.mxu0 0.0
  %447 = vmatpush2.msra.mxu0 0.0
  %448 = vmatprep.mubr.f32.mxu0 0.0
  %449 = vmatmul.mubr.f32.gmra.mxu0 %v382
  %v450 = vpop.f32.mrf.mxu0
  %v451 = vadd.f32 0.0, %v450
  %v452 = vpop.f32.mrf.mxu0
  %453 = vdwg.mxu0
  %v454 = vadd.f32 %v158, %v451
  %v455 = vmul.f32 %v454, %v34
  %v456 = vtanh.pop %v455
  %v457 = vmul.f32 %v456, %v34
  %v458 = vadd.f32 %v457, %v35
  %v459 = vmul.f32 %v458, %v372
  %461 = vrot.lane.b32.xlu0 %v458, 64
  %v462 = vpop.permute.xlu0 %461
  %v464 = vmul.f32 %v458, %v462
  %466 = vrot.lane.b32.xlu0 %v464, 32
  %v467 = vpop.permute.xlu0 %466
  %v469 = vadd.f32 %v459, %v467
  %v470 = vtanh.pop %v469
  %472 = vrot.lane.b32.xlu0 %v470, 64
  %v473 = vpop.permute.xlu0 %472
  %v475 = vmul.f32 %v458, %v473
  %477 = vrot.lane.b32.xlu0 %v475, 32
  %v478 = vpop.permute.xlu0 %477
  %v479 = vsel %vm186, %v478, 0
  %481 = vmatprep.subr.mxu0 0.0
  %482 = vmatpush1.msra.mxu0 0.0
  %483 = vmatprep.subr.mxu0 0.0
  %484 = vmatpush1.msra.mxu0 0.0
  %485 = vmatprep.subr.mxu0 0.0
  %486 = vmatpush1.msra.mxu0 0.0
  %487 = vmatprep.subr.mxu0 0.0
  %488 = vmatpush1.msra.mxu0 0.0
  %489 = vmatprep.subr.mxu0 0.0
  %490 = vmatpush1.msra.mxu0 0.0
  %491 = vmatprep.subr.mxu0 0.0
  %492 = vmatpush1.msra.mxu0 0.0
  %493 = vmatprep.subr.mxu0 0.0
  %494 = vmatpush1.msra.mxu0 0.0
  %495 = vmatprep.subr.mxu0 0.0
  %496 = vmatpush1.msra.mxu0 0.0
  %497 = vmatprep.subr.mxu0 0.0
  %498 = vmatpush1.msra.mxu0 0.0
  %499 = vmatprep.subr.mxu0 0.0
  %500 = vmatpush1.msra.mxu0 0.0
  %501 = vmatprep.subr.mxu0 0.0
  %502 = vmatpush1.msra.mxu0 0.0
  %503 = vmatprep.subr.mxu0 0.0
  %504 = vmatpush1.msra.mxu0 0.0
  %505 = vmatprep.subr.mxu0 0.0
  %506 = vmatpush1.msra.mxu0 %v39
  %507 = vmatprep.subr.mxu0 0.0
  %508 = vmatpush1.msra.mxu0 %v38
  %509 = vmatprep.subr.mxu0 0.0
  %510 = vmatpush1.msra.mxu0 %v37
  %511 = vmatprep.subr.mxu0 0.0
  %512 = vmatpush1.msra.mxu0 %v36
  %513 = vmatprep.subr.mxu0 0.0
  %514 = vmatpush2.msra.mxu0 0.0
  %515 = vmatprep.subr.mxu0 0.0
  %516 = vmatpush2.msra.mxu0 0.0
  %517 = vmatprep.subr.mxu0 0.0
  %518 = vmatpush2.msra.mxu0 0.0
  %519 = vmatprep.subr.mxu0 0.0
  %520 = vmatpush2.msra.mxu0 0.0
  %521 = vmatprep.subr.mxu0 0.0
  %522 = vmatpush2.msra.mxu0 0.0
  %523 = vmatprep.subr.mxu0 0.0
  %524 = vmatpush2.msra.mxu0 0.0
  %525 = vmatprep.subr.mxu0 0.0
  %526 = vmatpush2.msra.mxu0 0.0
  %527 = vmatprep.subr.mxu0 0.0
  %528 = vmatpush2.msra.mxu0 0.0
  %529 = vmatprep.subr.mxu0 0.0
  %530 = vmatpush2.msra.mxu0 0.0
  %531 = vmatprep.subr.mxu0 0.0
  %532 = vmatpush2.msra.mxu0 0.0
  %533 = vmatprep.subr.mxu0 0.0
  %534 = vmatpush2.msra.mxu0 0.0
  %535 = vmatprep.subr.mxu0 0.0
  %536 = vmatpush2.msra.mxu0 0.0
  %537 = vmatprep.subr.mxu0 0.0
  %538 = vmatpush2.msra.mxu0 0.0
  %539 = vmatprep.subr.mxu0 0.0
  %540 = vmatpush2.msra.mxu0 0.0
  %541 = vmatprep.subr.mxu0 0.0
  %542 = vmatpush2.msra.mxu0 0.0
  %543 = vmatprep.subr.mxu0 0.0
  %544 = vmatpush2.msra.mxu0 0.0
  %545 = vmatprep.mubr.f32.mxu0 0.0
  %546 = vmatmul.mubr.f32.gmra.mxu0 %v479
  %v547 = vpop.f32.mrf.mxu0
  %v548 = vadd.f32 0.0, %v547
  %v549 = vpop.f32.mrf.mxu0
  %550 = vdwg.mxu0
  %v551 = vadd.f32 %v163, %v548
  %v552 = vmul.f32 %v551, %v34
  %v553 = vtanh.pop %v552
  %v554 = vmul.f32 %v553, %v34
  %v555 = vadd.f32 %v554, %v35
  %v556 = vmul.f32 %v555, %v469
  %558 = vrot.lane.b32.xlu0 %v555, 64
  %v559 = vpop.permute.xlu0 %558
  %v561 = vmul.f32 %v555, %v559
  %563 = vrot.lane.b32.xlu0 %v561, 32
  %v564 = vpop.permute.xlu0 %563
  %v566 = vadd.f32 %v556, %v564
  %v567 = vtanh.pop %v566
  %569 = vrot.lane.b32.xlu0 %v567, 64
  %v570 = vpop.permute.xlu0 %569
  %v572 = vmul.f32 %v555, %v570
  %574 = vrot.lane.b32.xlu0 %v572, 32
  %v575 = vpop.permute.xlu0 %574
  %v576 = vsel %vm186, %v575, 0
  %578 = vmatprep.subr.mxu0 0.0
  %579 = vmatpush1.msra.mxu0 0.0
  %580 = vmatprep.subr.mxu0 0.0
  %581 = vmatpush1.msra.mxu0 0.0
  %582 = vmatprep.subr.mxu0 0.0
  %583 = vmatpush1.msra.mxu0 0.0
  %584 = vmatprep.subr.mxu0 0.0
  %585 = vmatpush1.msra.mxu0 0.0
  %586 = vmatprep.subr.mxu0 0.0
  %587 = vmatpush1.msra.mxu0 0.0
  %588 = vmatprep.subr.mxu0 0.0
  %589 = vmatpush1.msra.mxu0 0.0
  %590 = vmatprep.subr.mxu0 0.0
  %591 = vmatpush1.msra.mxu0 0.0
  %592 = vmatprep.subr.mxu0 0.0
  %593 = vmatpush1.msra.mxu0 0.0
  %594 = vmatprep.subr.mxu0 0.0
  %595 = vmatpush1.msra.mxu0 0.0
  %596 = vmatprep.subr.mxu0 0.0
  %597 = vmatpush1.msra.mxu0 0.0
  %598 = vmatprep.subr.mxu0 0.0
  %599 = vmatpush1.msra.mxu0 0.0
  %600 = vmatprep.subr.mxu0 0.0
  %601 = vmatpush1.msra.mxu0 0.0
  %602 = vmatprep.subr.mxu0 0.0
  %603 = vmatpush1.msra.mxu0 %v39
  %604 = vmatprep.subr.mxu0 0.0
  %605 = vmatpush1.msra.mxu0 %v38
  %606 = vmatprep.subr.mxu0 0.0
  %607 = vmatpush1.msra.mxu0 %v37
  %608 = vmatprep.subr.mxu0 0.0
  %609 = vmatpush1.msra.mxu0 %v36
  %610 = vmatprep.subr.mxu0 0.0
  %611 = vmatpush2.msra.mxu0 0.0
  %612 = vmatprep.subr.mxu0 0.0
  %613 = vmatpush2.msra.mxu0 0.0
  %614 = vmatprep.subr.mxu0 0.0
  %615 = vmatpush2.msra.mxu0 0.0
  %616 = vmatprep.subr.mxu0 0.0
  %617 = vmatpush2.msra.mxu0 0.0
  %618 = vmatprep.subr.mxu0 0.0
  %619 = vmatpush2.msra.mxu0 0.0
  %620 = vmatprep.subr.mxu0 0.0
  %621 = vmatpush2.msra.mxu0 0.0
  %622 = vmatprep.subr.mxu0 0.0
  %623 = vmatpush2.msra.mxu0 0.0
  %624 = vmatprep.subr.mxu0 0.0
  %625 = vmatpush2.msra.mxu0 0.0
  %626 = vmatprep.subr.mxu0 0.0
  %627 = vmatpush2.msra.mxu0 0.0
  %628 = vmatprep.subr.mxu0 0.0
  %629 = vmatpush2.msra.mxu0 0.0
  %630 = vmatprep.subr.mxu0 0.0
  %631 = vmatpush2.msra.mxu0 0.0
  %632 = vmatprep.subr.mxu0 0.0
  %633 = vmatpush2.msra.mxu0 0.0
  %634 = vmatprep.subr.mxu0 0.0
  %635 = vmatpush2.msra.mxu0 0.0
  %636 = vmatprep.subr.mxu0 0.0
  %637 = vmatpush2.msra.mxu0 0.0
  %638 = vmatprep.subr.mxu0 0.0
  %639 = vmatpush2.msra.mxu0 0.0
  %640 = vmatprep.subr.mxu0 0.0
  %641 = vmatpush2.msra.mxu0 0.0
  %642 = vmatprep.mubr.f32.mxu0 0.0
  %643 = vmatmul.mubr.f32.gmra.mxu0 %v576
  %v644 = vpop.f32.mrf.mxu0
  %v645 = vadd.f32 0.0, %v644
  %v646 = vpop.f32.mrf.mxu0
  %647 = vdwg.mxu0
  %v648 = vadd.f32 %v168, %v645
  %v649 = vmul.f32 %v648, %v34
  %v650 = vtanh.pop %v649
  %v651 = vmul.f32 %v650, %v34
  %v652 = vadd.f32 %v651, %v35
  %v653 = vmul.f32 %v652, %v566
  %655 = vrot.lane.b32.xlu0 %v652, 64
  %v656 = vpop.permute.xlu0 %655
  %v658 = vmul.f32 %v652, %v656
  %660 = vrot.lane.b32.xlu0 %v658, 32
  %v661 = vpop.permute.xlu0 %660
  %v663 = vadd.f32 %v653, %v661
  %v664 = vtanh.pop %v663
  %666 = vrot.lane.b32.xlu0 %v664, 64
  %v667 = vpop.permute.xlu0 %666
  %v669 = vmul.f32 %v652, %v667
  %671 = vrot.lane.b32.xlu0 %v669, 32
  %v672 = vpop.permute.xlu0 %671
  %v673 = vsel %vm186, %v672, 0
  %675 = vmatprep.subr.mxu0 0.0
  %676 = vmatpush1.msra.mxu0 0.0
  %677 = vmatprep.subr.mxu0 0.0
  %678 = vmatpush1.msra.mxu0 0.0
  %679 = vmatprep.subr.mxu0 0.0
  %680 = vmatpush1.msra.mxu0 0.0
  %681 = vmatprep.subr.mxu0 0.0
  %682 = vmatpush1.msra.mxu0 0.0
  %683 = vmatprep.subr.mxu0 0.0
  %684 = vmatpush1.msra.mxu0 0.0
  %685 = vmatprep.subr.mxu0 0.0
  %686 = vmatpush1.msra.mxu0 0.0
  %687 = vmatprep.subr.mxu0 0.0
  %688 = vmatpush1.msra.mxu0 0.0
  %689 = vmatprep.subr.mxu0 0.0
  %690 = vmatpush1.msra.mxu0 0.0
  %691 = vmatprep.subr.mxu0 0.0
  %692 = vmatpush1.msra.mxu0 0.0
  %693 = vmatprep.subr.mxu0 0.0
  %694 = vmatpush1.msra.mxu0 0.0
  %695 = vmatprep.subr.mxu0 0.0
  %696 = vmatpush1.msra.mxu0 0.0
  %697 = vmatprep.subr.mxu0 0.0
  %698 = vmatpush1.msra.mxu0 0.0
  %699 = vmatprep.subr.mxu0 0.0
  %700 = vmatpush1.msra.mxu0 %v39
  %701 = vmatprep.subr.mxu0 0.0
  %702 = vmatpush1.msra.mxu0 %v38
  %703 = vmatprep.subr.mxu0 0.0
  %704 = vmatpush1.msra.mxu0 %v37
  %705 = vmatprep.subr.mxu0 0.0
  %706 = vmatpush1.msra.mxu0 %v36
  %707 = vmatprep.subr.mxu0 0.0
  %708 = vmatpush2.msra.mxu0 0.0
  %709 = vmatprep.subr.mxu0 0.0
  %710 = vmatpush2.msra.mxu0 0.0
  %711 = vmatprep.subr.mxu0 0.0
  %712 = vmatpush2.msra.mxu0 0.0
  %713 = vmatprep.subr.mxu0 0.0
  %714 = vmatpush2.msra.mxu0 0.0
  %715 = vmatprep.subr.mxu0 0.0
  %716 = vmatpush2.msra.mxu0 0.0
  %717 = vmatprep.subr.mxu0 0.0
  %718 = vmatpush2.msra.mxu0 0.0
  %719 = vmatprep.subr.mxu0 0.0
  %720 = vmatpush2.msra.mxu0 0.0
  %721 = vmatprep.subr.mxu0 0.0
  %722 = vmatpush2.msra.mxu0 0.0
  %723 = vmatprep.subr.mxu0 0.0
  %724 = vmatpush2.msra.mxu0 0.0
  %725 = vmatprep.subr.mxu0 0.0
  %726 = vmatpush2.msra.mxu0 0.0
  %727 = vmatprep.subr.mxu0 0.0
  %728 = vmatpush2.msra.mxu0 0.0
  %729 = vmatprep.subr.mxu0 0.0
  %730 = vmatpush2.msra.mxu0 0.0
  %731 = vmatprep.subr.mxu0 0.0
  %732 = vmatpush2.msra.mxu0 0.0
  %733 = vmatprep.subr.mxu0 0.0
  %734 = vmatpush2.msra.mxu0 0.0
  %735 = vmatprep.subr.mxu0 0.0
  %736 = vmatpush2.msra.mxu0 0.0
  %737 = vmatprep.subr.mxu0 0.0
  %738 = vmatpush2.msra.mxu0 0.0
  %739 = vmatprep.mubr.f32.mxu0 0.0
  %740 = vmatmul.mubr.f32.gmra.mxu0 %v673
  %v741 = vpop.f32.mrf.mxu0
  %v742 = vadd.f32 0.0, %v741
  %v743 = vpop.f32.mrf.mxu0
  %744 = vdwg.mxu0
  %v745 = vadd.f32 %v173, %v742
  %v746 = vmul.f32 %v745, %v34
  %v747 = vtanh.pop %v746
  %v748 = vmul.f32 %v747, %v34
  %v749 = vadd.f32 %v748, %v35
  %v750 = vmul.f32 %v749, %v663
  %752 = vrot.lane.b32.xlu0 %v749, 64
  %v753 = vpop.permute.xlu0 %752
  %v755 = vmul.f32 %v749, %v753
  %757 = vrot.lane.b32.xlu0 %v755, 32
  %v758 = vpop.permute.xlu0 %757
  %v760 = vadd.f32 %v750, %v758
  %v761 = vtanh.pop %v760
  %763 = vrot.lane.b32.xlu0 %v761, 64
  %v764 = vpop.permute.xlu0 %763
  %v766 = vmul.f32 %v749, %v764
  %768 = vrot.lane.b32.xlu0 %v766, 32
  %v769 = vpop.permute.xlu0 %768
  %v770 = vsel %vm186, %v769, 0
  %772 = vmatprep.subr.mxu0 0.0
  %773 = vmatpush1.msra.mxu0 0.0
  %774 = vmatprep.subr.mxu0 0.0
  %775 = vmatpush1.msra.mxu0 0.0
  %776 = vmatprep.subr.mxu0 0.0
  %777 = vmatpush1.msra.mxu0 0.0
  %778 = vmatprep.subr.mxu0 0.0
  %779 = vmatpush1.msra.mxu0 0.0
  %780 = vmatprep.subr.mxu0 0.0
  %781 = vmatpush1.msra.mxu0 0.0
  %782 = vmatprep.subr.mxu0 0.0
  %783 = vmatpush1.msra.mxu0 0.0
  %784 = vmatprep.subr.mxu0 0.0
  %785 = vmatpush1.msra.mxu0 0.0
  %786 = vmatprep.subr.mxu0 0.0
  %787 = vmatpush1.msra.mxu0 0.0
  %788 = vmatprep.subr.mxu0 0.0
  %789 = vmatpush1.msra.mxu0 0.0
  %790 = vmatprep.subr.mxu0 0.0
  %791 = vmatpush1.msra.mxu0 0.0
  %792 = vmatprep.subr.mxu0 0.0
  %793 = vmatpush1.msra.mxu0 0.0
  %794 = vmatprep.subr.mxu0 0.0
  %795 = vmatpush1.msra.mxu0 0.0
  %796 = vmatprep.subr.mxu0 0.0
  %797 = vmatpush1.msra.mxu0 %v39
  %798 = vmatprep.subr.mxu0 0.0
  %799 = vmatpush1.msra.mxu0 %v38
  %800 = vmatprep.subr.mxu0 0.0
  %801 = vmatpush1.msra.mxu0 %v37
  %802 = vmatprep.subr.mxu0 0.0
  %803 = vmatpush1.msra.mxu0 %v36
  %804 = vmatprep.subr.mxu0 0.0
  %805 = vmatpush2.msra.mxu0 0.0
  %806 = vmatprep.subr.mxu0 0.0
  %807 = vmatpush2.msra.mxu0 0.0
  %808 = vmatprep.subr.mxu0 0.0
  %809 = vmatpush2.msra.mxu0 0.0
  %810 = vmatprep.subr.mxu0 0.0
  %811 = vmatpush2.msra.mxu0 0.0
  %812 = vmatprep.subr.mxu0 0.0
  %813 = vmatpush2.msra.mxu0 0.0
  %814 = vmatprep.subr.mxu0 0.0
  %815 = vmatpush2.msra.mxu0 0.0
  %816 = vmatprep.subr.mxu0 0.0
  %817 = vmatpush2.msra.mxu0 0.0
  %818 = vmatprep.subr.mxu0 0.0
  %819 = vmatpush2.msra.mxu0 0.0
  %820 = vmatprep.subr.mxu0 0.0
  %821 = vmatpush2.msra.mxu0 0.0
  %822 = vmatprep.subr.mxu0 0.0
  %823 = vmatpush2.msra.mxu0 0.0
  %824 = vmatprep.subr.mxu0 0.0
  %825 = vmatpush2.msra.mxu0 0.0
  %826 = vmatprep.subr.mxu0 0.0
  %827 = vmatpush2.msra.mxu0 0.0
  %828 = vmatprep.subr.mxu0 0.0
  %829 = vmatpush2.msra.mxu0 0.0
  %830 = vmatprep.subr.mxu0 0.0
  %831 = vmatpush2.msra.mxu0 0.0
  %832 = vmatprep.subr.mxu0 0.0
  %833 = vmatpush2.msra.mxu0 0.0
  %834 = vmatprep.subr.mxu0 0.0
  %835 = vmatpush2.msra.mxu0 0.0
  %836 = vmatprep.mubr.f32.mxu0 0.0
  %837 = vmatmul.mubr.f32.gmra.mxu0 %v770
  %v838 = vpop.f32.mrf.mxu0
  %v839 = vadd.f32 0.0, %v838
  %v840 = vpop.f32.mrf.mxu0
  %841 = vdwg.mxu0
  %v842 = vadd.f32 %v178, %v839
  %v843 = vmul.f32 %v842, %v34
  %v844 = vtanh.pop %v843
  %v845 = vmul.f32 %v844, %v34
  %v846 = vadd.f32 %v845, %v35
  %v847 = vmul.f32 %v846, %v760
  %849 = vrot.lane.b32.xlu0 %v846, 64
  %v850 = vpop.permute.xlu0 %849
  %v852 = vmul.f32 %v846, %v850
  %854 = vrot.lane.b32.xlu0 %v852, 32
  %v855 = vpop.permute.xlu0 %854
  %v857 = vadd.f32 %v847, %v855
  %v858 = vtanh.pop %v857
  %860 = vrot.lane.b32.xlu0 %v858, 64
  %v861 = vpop.permute.xlu0 %860
  %v863 = vmul.f32 %v846, %v861
  %865 = vrot.lane.b32.xlu0 %v863, 32
  %v866 = vpop.permute.xlu0 %865
  %v867 = vsel %vm186, %v866, 0
  %869 = vmatprep.subr.mxu0 0.0
  %870 = vmatpush1.msra.mxu0 0.0
  %871 = vmatprep.subr.mxu0 0.0
  %872 = vmatpush1.msra.mxu0 0.0
  %873 = vmatprep.subr.mxu0 0.0
  %874 = vmatpush1.msra.mxu0 0.0
  %875 = vmatprep.subr.mxu0 0.0
  %876 = vmatpush1.msra.mxu0 0.0
  %877 = vmatprep.subr.mxu0 0.0
  %878 = vmatpush1.msra.mxu0 0.0
  %879 = vmatprep.subr.mxu0 0.0
  %880 = vmatpush1.msra.mxu0 0.0
  %881 = vmatprep.subr.mxu0 0.0
  %882 = vmatpush1.msra.mxu0 0.0
  %883 = vmatprep.subr.mxu0 0.0
  %884 = vmatpush1.msra.mxu0 0.0
  %885 = vmatprep.subr.mxu0 0.0
  %886 = vmatpush1.msra.mxu0 0.0
  %887 = vmatprep.subr.mxu0 0.0
  %888 = vmatpush1.msra.mxu0 0.0
  %889 = vmatprep.subr.mxu0 0.0
  %890 = vmatpush1.msra.mxu0 0.0
  %891 = vmatprep.subr.mxu0 0.0
  %892 = vmatpush1.msra.mxu0 0.0
  %893 = vmatprep.subr.mxu0 0.0
  %894 = vmatpush1.msra.mxu0 %v39
  %895 = vmatprep.subr.mxu0 0.0
  %896 = vmatpush1.msra.mxu0 %v38
  %897 = vmatprep.subr.mxu0 0.0
  %898 = vmatpush1.msra.mxu0 %v37
  %899 = vmatprep.subr.mxu0 0.0
  %900 = vmatpush1.msra.mxu0 %v36
  %901 = vmatprep.subr.mxu0 0.0
  %902 = vmatpush2.msra.mxu0 0.0
  %903 = vmatprep.subr.mxu0 0.0
  %904 = vmatpush2.msra.mxu0 0.0
  %905 = vmatprep.subr.mxu0 0.0
  %906 = vmatpush2.msra.mxu0 0.0
  %907 = vmatprep.subr.mxu0 0.0
  %908 = vmatpush2.msra.mxu0 0.0
  %909 = vmatprep.subr.mxu0 0.0
  %910 = vmatpush2.msra.mxu0 0.0
  %911 = vmatprep.subr.mxu0 0.0
  %912 = vmatpush2.msra.mxu0 0.0
  %913 = vmatprep.subr.mxu0 0.0
  %914 = vmatpush2.msra.mxu0 0.0
  %915 = vmatprep.subr.mxu0 0.0
  %916 = vmatpush2.msra.mxu0 0.0
  %917 = vmatprep.subr.mxu0 0.0
  %918 = vmatpush2.msra.mxu0 0.0
  %919 = vmatprep.subr.mxu0 0.0
  %920 = vmatpush2.msra.mxu0 0.0
  %921 = vmatprep.subr.mxu0 0.0
  %922 = vmatpush2.msra.mxu0 0.0
  %923 = vmatprep.subr.mxu0 0.0
  %924 = vmatpush2.msra.mxu0 0.0
  %925 = vmatprep.subr.mxu0 0.0
  %926 = vmatpush2.msra.mxu0 0.0
  %927 = vmatprep.subr.mxu0 0.0
  %928 = vmatpush2.msra.mxu0 0.0
  %929 = vmatprep.subr.mxu0 0.0
  %930 = vmatpush2.msra.mxu0 0.0
  %931 = vmatprep.subr.mxu0 0.0
  %932 = vmatpush2.msra.mxu0 0.0
  %933 = vmatprep.mubr.f32.mxu0 0.0
  %934 = vmatmul.mubr.f32.gmra.mxu0 %v867
  %v935 = vpop.f32.mrf.mxu0
  %v936 = vadd.f32 0.0, %v935
  %v937 = vpop.f32.mrf.mxu0
  %938 = vdwg.mxu0
  %v939 = vadd.f32 %v183, %v936
  %v940 = vmul.f32 %v939, %v34
  %v941 = vtanh.pop %v940
  %v942 = vmul.f32 %v941, %v34
  %v943 = vadd.f32 %v942, %v35
  %v944 = vmul.f32 %v943, %v857
  %946 = vrot.lane.b32.xlu0 %v943, 64
  %v947 = vpop.permute.xlu0 %946
  %v949 = vmul.f32 %v943, %v947
  %951 = vrot.lane.b32.xlu0 %v949, 32
  %v952 = vpop.permute.xlu0 %951
  %v954 = vadd.f32 %v944, %v952
  %v955 = vtanh.pop %v954
  %957 = vrot.lane.b32.xlu0 %v955, 64
  %v958 = vpop.permute.xlu0 %957
  %v960 = vmul.f32 %v943, %v958
  %v961 = vld [vmem:[%s4] sm:$0xff]
  %v962 = vld [vmem:[%s4 + $0x8] sm:$0xff]
  %v963 = vld [vmem:[%s4 + $0x10] sm:$0xff]
  %v964 = vld [vmem:[%s4 + $0x18] sm:$0xff]
  %v965 = vld [vmem:[%s4 + $0x20] sm:$0xff]
  %v966 = vld [vmem:[%s4 + $0x28] sm:$0xff]
  %v967 = vld [vmem:[%s4 + $0x30] sm:$0xff]
  %v968 = vld [vmem:[%s4 + $0x38] sm:$0xff]
  %v969 = vld [vmem:[%s5] sm:$0x1]
  %v971 = vlaneseq
  %v972 = vshrl.u32 %v971, 7
  %v973 = vsub.s32 0, %v972
  %v974 = vrot.slane %v969, %v973
  %v977 = vsel %vm186, %v284, 0.0
  %vm978 = vcmask 523264
  %v980 = vsel %vm978, %v977, 0
  %982 = vmatprep.subr.mxu0 0.0
  %983 = vmatpush1.msra.mxu0 0.0
  %984 = vmatprep.subr.mxu0 0.0
  %985 = vmatpush1.msra.mxu0 0.0
  %986 = vmatprep.subr.mxu0 0.0
  %987 = vmatpush1.msra.mxu0 0.0
  %988 = vmatprep.subr.mxu0 0.0
  %989 = vmatpush1.msra.mxu0 0.0
  %990 = vmatprep.subr.mxu0 0.0
  %991 = vmatpush1.msra.mxu0 0.0
  %992 = vmatprep.subr.mxu0 0.0
  %993 = vmatpush1.msra.mxu0 0.0
  %994 = vmatprep.subr.mxu0 0.0
  %995 = vmatpush1.msra.mxu0 0.0
  %996 = vmatprep.subr.mxu0 0.0
  %997 = vmatpush1.msra.mxu0 0.0
  %998 = vmatprep.subr.mxu0 0.0
  %999 = vmatpush1.msra.mxu0 %v968
  %1000 = vmatprep.subr.mxu0 0.0
  %1001 = vmatpush1.msra.mxu0 %v967
  %1002 = vmatprep.subr.mxu0 0.0
  %1003 = vmatpush1.msra.mxu0 %v966
  %1004 = vmatprep.subr.mxu0 0.0
  %1005 = vmatpush1.msra.mxu0 %v965
  %1006 = vmatprep.subr.mxu0 0.0
  %1007 = vmatpush1.msra.mxu0 %v964
  %1008 = vmatprep.subr.mxu0 0.0
  %1009 = vmatpush1.msra.mxu0 %v963
  %1010 = vmatprep.subr.mxu0 0.0
  %1011 = vmatpush1.msra.mxu0 %v962
  %1012 = vmatprep.subr.mxu0 0.0
  %1013 = vmatpush1.msra.mxu0 %v961
  %1014 = vmatprep.subr.mxu0 0.0
  %1015 = vmatpush2.msra.mxu0 0.0
  %1016 = vmatprep.subr.mxu0 0.0
  %1017 = vmatpush2.msra.mxu0 0.0
  %1018 = vmatprep.subr.mxu0 0.0
  %1019 = vmatpush2.msra.mxu0 0.0
  %1020 = vmatprep.subr.mxu0 0.0
  %1021 = vmatpush2.msra.mxu0 0.0
  %1022 = vmatprep.subr.mxu0 0.0
  %1023 = vmatpush2.msra.mxu0 0.0
  %1024 = vmatprep.subr.mxu0 0.0
  %1025 = vmatpush2.msra.mxu0 0.0
  %1026 = vmatprep.subr.mxu0 0.0
  %1027 = vmatpush2.msra.mxu0 0.0
  %1028 = vmatprep.subr.mxu0 0.0
  %1029 = vmatpush2.msra.mxu0 0.0
  %1030 = vmatprep.subr.mxu0 0.0
  %1031 = vmatpush2.msra.mxu0 0.0
  %1032 = vmatprep.subr.mxu0 0.0
  %1033 = vmatpush2.msra.mxu0 0.0
  %1034 = vmatprep.subr.mxu0 0.0
  %1035 = vmatpush2.msra.mxu0 0.0
  %1036 = vmatprep.subr.mxu0 0.0
  %1037 = vmatpush2.msra.mxu0 0.0
  %1038 = vmatprep.subr.mxu0 0.0
  %1039 = vmatpush2.msra.mxu0 0.0
  %1040 = vmatprep.subr.mxu0 0.0
  %1041 = vmatpush2.msra.mxu0 0.0
  %1042 = vmatprep.subr.mxu0 0.0
  %1043 = vmatpush2.msra.mxu0 0.0
  %1044 = vmatprep.subr.mxu0 0.0
  %1045 = vmatpush2.msra.mxu0 0.0
  %1046 = vmatprep.mubr.f32.mxu0 0.0
  %1047 = vmatmul.mubr.f32.gmra.mxu0 %v980
  %v1048 = vpop.f32.mrf.mxu0
  %v1049 = vadd.f32 %v974, %v1048
  %v1050 = vpop.f32.mrf.mxu0
  %1051 = vdwg.mxu0
  %v1052 = vmul.f32 %v1049, %v34
  %v1053 = vtanh.pop %v1052
  %v1054 = vmul.f32 %v1053, %v34
  %v1055 = vadd.f32 %v1054, %v35
  %v1056 = vmul.f32 %v1055, 0.0
  %1058 = vrot.lane.b32.xlu0 %v1055, 64
  %v1059 = vpop.permute.xlu0 %1058
  %v1061 = vmul.f32 %v1055, %v1059
  %1063 = vrot.lane.b32.xlu0 %v1061, 32
  %v1064 = vpop.permute.xlu0 %1063
  %v1066 = vadd.f32 %v1056, %v1064
  %v1067 = vtanh.pop %v1066
  %1069 = vrot.lane.b32.xlu0 %v1067, 64
  %v1070 = vpop.permute.xlu0 %1069
  %v1072 = vmul.f32 %v1055, %v1070
  %1075 = vrot.lane.b32.xlu0 %v1072, 64
  %v1076 = vpop.permute.xlu0 %1075
  %v1078 = vsel %vm186, %v381, %v1076
  %v1080 = vsel %vm978, %v1078, 0
  %1082 = vmatprep.subr.mxu0 0.0
  %1083 = vmatpush1.msra.mxu0 0.0
  %1084 = vmatprep.subr.mxu0 0.0
  %1085 = vmatpush1.msra.mxu0 0.0
  %1086 = vmatprep.subr.mxu0 0.0
  %1087 = vmatpush1.msra.mxu0 0.0
  %1088 = vmatprep.subr.mxu0 0.0
  %1089 = vmatpush1.msra.mxu0 0.0
  %1090 = vmatprep.subr.mxu0 0.0
  %1091 = vmatpush1.msra.mxu0 0.0
  %1092 = vmatprep.subr.mxu0 0.0
  %1093 = vmatpush1.msra.mxu0 0.0
  %1094 = vmatprep.subr.mxu0 0.0
  %1095 = vmatpush1.msra.mxu0 0.0
  %1096 = vmatprep.subr.mxu0 0.0
  %1097 = vmatpush1.msra.mxu0 0.0
  %1098 = vmatprep.subr.mxu0 0.0
  %1099 = vmatpush1.msra.mxu0 %v968
  %1100 = vmatprep.subr.mxu0 0.0
  %1101 = vmatpush1.msra.mxu0 %v967
  %1102 = vmatprep.subr.mxu0 0.0
  %1103 = vmatpush1.msra.mxu0 %v966
  %1104 = vmatprep.subr.mxu0 0.0
  %1105 = vmatpush1.msra.mxu0 %v965
  %1106 = vmatprep.subr.mxu0 0.0
  %1107 = vmatpush1.msra.mxu0 %v964
  %1108 = vmatprep.subr.mxu0 0.0
  %1109 = vmatpush1.msra.mxu0 %v963
  %1110 = vmatprep.subr.mxu0 0.0
  %1111 = vmatpush1.msra.mxu0 %v962
  %1112 = vmatprep.subr.mxu0 0.0
  %1113 = vmatpush1.msra.mxu0 %v961
  %1114 = vmatprep.subr.mxu0 0.0
  %1115 = vmatpush2.msra.mxu0 0.0
  %1116 = vmatprep.subr.mxu0 0.0
  %1117 = vmatpush2.msra.mxu0 0.0
  %1118 = vmatprep.subr.mxu0 0.0
  %1119 = vmatpush2.msra.mxu0 0.0
  %1120 = vmatprep.subr.mxu0 0.0
  %1121 = vmatpush2.msra.mxu0 0.0
  %1122 = vmatprep.subr.mxu0 0.0
  %1123 = vmatpush2.msra.mxu0 0.0
  %1124 = vmatprep.subr.mxu0 0.0
  %1125 = vmatpush2.msra.mxu0 0.0
  %1126 = vmatprep.subr.mxu0 0.0
  %1127 = vmatpush2.msra.mxu0 0.0
  %1128 = vmatprep.subr.mxu0 0.0
  %1129 = vmatpush2.msra.mxu0 0.0
  %1130 = vmatprep.subr.mxu0 0.0
  %1131 = vmatpush2.msra.mxu0 0.0
  %1132 = vmatprep.subr.mxu0 0.0
  %1133 = vmatpush2.msra.mxu0 0.0
  %1134 = vmatprep.subr.mxu0 0.0
  %1135 = vmatpush2.msra.mxu0 0.0
  %1136 = vmatprep.subr.mxu0 0.0
  %1137 = vmatpush2.msra.mxu0 0.0
  %1138 = vmatprep.subr.mxu0 0.0
  %1139 = vmatpush2.msra.mxu0 0.0
  %1140 = vmatprep.subr.mxu0 0.0
  %1141 = vmatpush2.msra.mxu0 0.0
  %1142 = vmatprep.subr.mxu0 0.0
  %1143 = vmatpush2.msra.mxu0 0.0
  %1144 = vmatprep.subr.mxu0 0.0
  %1145 = vmatpush2.msra.mxu0 0.0
  %1146 = vmatprep.mubr.f32.mxu0 0.0
  %1147 = vmatmul.mubr.f32.gmra.mxu0 %v1080
  %v1148 = vpop.f32.mrf.mxu0
  %v1149 = vadd.f32 %v974, %v1148
  %v1150 = vpop.f32.mrf.mxu0
  %1151 = vdwg.mxu0
  %v1152 = vmul.f32 %v1149, %v34
  %v1153 = vtanh.pop %v1152
  %v1154 = vmul.f32 %v1153, %v34
  %v1155 = vadd.f32 %v1154, %v35
  %v1156 = vmul.f32 %v1155, %v1066
  %1158 = vrot.lane.b32.xlu0 %v1155, 64
  %v1159 = vpop.permute.xlu0 %1158
  %v1161 = vmul.f32 %v1155, %v1159
  %1163 = vrot.lane.b32.xlu0 %v1161, 32
  %v1164 = vpop.permute.xlu0 %1163
  %v1166 = vadd.f32 %v1156, %v1164
  %v1167 = vtanh.pop %v1166
  %1169 = vrot.lane.b32.xlu0 %v1167, 64
  %v1170 = vpop.permute.xlu0 %1169
  %v1172 = vmul.f32 %v1155, %v1170
  %1175 = vrot.lane.b32.xlu0 %v1172, 64
  %v1176 = vpop.permute.xlu0 %1175
  %v1178 = vsel %vm186, %v478, %v1176
  %v1180 = vsel %vm978, %v1178, 0
  %1182 = vmatprep.subr.mxu0 0.0
  %1183 = vmatpush1.msra.mxu0 0.0
  %1184 = vmatprep.subr.mxu0 0.0
  %1185 = vmatpush1.msra.mxu0 0.0
  %1186 = vmatprep.subr.mxu0 0.0
  %1187 = vmatpush1.msra.mxu0 0.0
  %1188 = vmatprep.subr.mxu0 0.0
  %1189 = vmatpush1.msra.mxu0 0.0
  %1190 = vmatprep.subr.mxu0 0.0
  %1191 = vmatpush1.msra.mxu0 0.0
  %1192 = vmatprep.subr.mxu0 0.0
  %1193 = vmatpush1.msra.mxu0 0.0
  %1194 = vmatprep.subr.mxu0 0.0
  %1195 = vmatpush1.msra.mxu0 0.0
  %1196 = vmatprep.subr.mxu0 0.0
  %1197 = vmatpush1.msra.mxu0 0.0
  %1198 = vmatprep.subr.mxu0 0.0
  %1199 = vmatpush1.msra.mxu0 %v968
  %1200 = vmatprep.subr.mxu0 0.0
  %1201 = vmatpush1.msra.mxu0 %v967
  %1202 = vmatprep.subr.mxu0 0.0
  %1203 = vmatpush1.msra.mxu0 %v966
  %1204 = vmatprep.subr.mxu0 0.0
  %1205 = vmatpush1.msra.mxu0 %v965
  %1206 = vmatprep.subr.mxu0 0.0
  %1207 = vmatpush1.msra.mxu0 %v964
  %1208 = vmatprep.subr.mxu0 0.0
  %1209 = vmatpush1.msra.mxu0 %v963
  %1210 = vmatprep.subr.mxu0 0.0
  %1211 = vmatpush1.msra.mxu0 %v962
  %1212 = vmatprep.subr.mxu0 0.0
  %1213 = vmatpush1.msra.mxu0 %v961
  %1214 = vmatprep.subr.mxu0 0.0
  %1215 = vmatpush2.msra.mxu0 0.0
  %1216 = vmatprep.subr.mxu0 0.0
  %1217 = vmatpush2.msra.mxu0 0.0
  %1218 = vmatprep.subr.mxu0 0.0
  %1219 = vmatpush2.msra.mxu0 0.0
  %1220 = vmatprep.subr.mxu0 0.0
  %1221 = vmatpush2.msra.mxu0 0.0
  %1222 = vmatprep.subr.mxu0 0.0
  %1223 = vmatpush2.msra.mxu0 0.0
  %1224 = vmatprep.subr.mxu0 0.0
  %1225 = vmatpush2.msra.mxu0 0.0
  %1226 = vmatprep.subr.mxu0 0.0
  %1227 = vmatpush2.msra.mxu0 0.0
  %1228 = vmatprep.subr.mxu0 0.0
  %1229 = vmatpush2.msra.mxu0 0.0
  %1230 = vmatprep.subr.mxu0 0.0
  %1231 = vmatpush2.msra.mxu0 0.0
  %1232 = vmatprep.subr.mxu0 0.0
  %1233 = vmatpush2.msra.mxu0 0.0
  %1234 = vmatprep.subr.mxu0 0.0
  %1235 = vmatpush2.msra.mxu0 0.0
  %1236 = vmatprep.subr.mxu0 0.0
  %1237 = vmatpush2.msra.mxu0 0.0
  %1238 = vmatprep.subr.mxu0 0.0
  %1239 = vmatpush2.msra.mxu0 0.0
  %1240 = vmatprep.subr.mxu0 0.0
  %1241 = vmatpush2.msra.mxu0 0.0
  %1242 = vmatprep.subr.mxu0 0.0
  %1243 = vmatpush2.msra.mxu0 0.0
  %1244 = vmatprep.subr.mxu0 0.0
  %1245 = vmatpush2.msra.mxu0 0.0
  %1246 = vmatprep.mubr.f32.mxu0 0.0
  %1247 = vmatmul.mubr.f32.gmra.mxu0 %v1180
  %v1248 = vpop.f32.mrf.mxu0
  %v1249 = vadd.f32 %v974, %v1248
  %v1250 = vpop.f32.mrf.mxu0
  %1251 = vdwg.mxu0
  %v1252 = vmul.f32 %v1249, %v34
  %v1253 = vtanh.pop %v1252
  %v1254 = vmul.f32 %v1253, %v34
  %v1255 = vadd.f32 %v1254, %v35
  %v1256 = vmul.f32 %v1255, %v1166
  %1258 = vrot.lane.b32.xlu0 %v1255, 64
  %v1259 = vpop.permute.xlu0 %1258
  %v1261 = vmul.f32 %v1255, %v1259
  %1263 = vrot.lane.b32.xlu0 %v1261, 32
  %v1264 = vpop.permute.xlu0 %1263
  %v1266 = vadd.f32 %v1256, %v1264
  %v1267 = vtanh.pop %v1266
  %1269 = vrot.lane.b32.xlu0 %v1267, 64
  %v1270 = vpop.permute.xlu0 %1269
  %v1272 = vmul.f32 %v1255, %v1270
  %1275 = vrot.lane.b32.xlu0 %v1272, 64
  %v1276 = vpop.permute.xlu0 %1275
  %v1278 = vsel %vm186, %v575, %v1276
  %v1280 = vsel %vm978, %v1278, 0
  %1282 = vmatprep.subr.mxu0 0.0
  %1283 = vmatpush1.msra.mxu0 0.0
  %1284 = vmatprep.subr.mxu0 0.0
  %1285 = vmatpush1.msra.mxu0 0.0
  %1286 = vmatprep.subr.mxu0 0.0
  %1287 = vmatpush1.msra.mxu0 0.0
  %1288 = vmatprep.subr.mxu0 0.0
  %1289 = vmatpush1.msra.mxu0 0.0
  %1290 = vmatprep.subr.mxu0 0.0
  %1291 = vmatpush1.msra.mxu0 0.0
  %1292 = vmatprep.subr.mxu0 0.0
  %1293 = vmatpush1.msra.mxu0 0.0
  %1294 = vmatprep.subr.mxu0 0.0
  %1295 = vmatpush1.msra.mxu0 0.0
  %1296 = vmatprep.subr.mxu0 0.0
  %1297 = vmatpush1.msra.mxu0 0.0
  %1298 = vmatprep.subr.mxu0 0.0
  %1299 = vmatpush1.msra.mxu0 %v968
  %1300 = vmatprep.subr.mxu0 0.0
  %1301 = vmatpush1.msra.mxu0 %v967
  %1302 = vmatprep.subr.mxu0 0.0
  %1303 = vmatpush1.msra.mxu0 %v966
  %1304 = vmatprep.subr.mxu0 0.0
  %1305 = vmatpush1.msra.mxu0 %v965
  %1306 = vmatprep.subr.mxu0 0.0
  %1307 = vmatpush1.msra.mxu0 %v964
  %1308 = vmatprep.subr.mxu0 0.0
  %1309 = vmatpush1.msra.mxu0 %v963
  %1310 = vmatprep.subr.mxu0 0.0
  %1311 = vmatpush1.msra.mxu0 %v962
  %1312 = vmatprep.subr.mxu0 0.0
  %1313 = vmatpush1.msra.mxu0 %v961
  %1314 = vmatprep.subr.mxu0 0.0
  %1315 = vmatpush2.msra.mxu0 0.0
  %1316 = vmatprep.subr.mxu0 0.0
  %1317 = vmatpush2.msra.mxu0 0.0
  %1318 = vmatprep.subr.mxu0 0.0
  %1319 = vmatpush2.msra.mxu0 0.0
  %1320 = vmatprep.subr.mxu0 0.0
  %1321 = vmatpush2.msra.mxu0 0.0
  %1322 = vmatprep.subr.mxu0 0.0
  %1323 = vmatpush2.msra.mxu0 0.0
  %1324 = vmatprep.subr.mxu0 0.0
  %1325 = vmatpush2.msra.mxu0 0.0
  %1326 = vmatprep.subr.mxu0 0.0
  %1327 = vmatpush2.msra.mxu0 0.0
  %1328 = vmatprep.subr.mxu0 0.0
  %1329 = vmatpush2.msra.mxu0 0.0
  %1330 = vmatprep.subr.mxu0 0.0
  %1331 = vmatpush2.msra.mxu0 0.0
  %1332 = vmatprep.subr.mxu0 0.0
  %1333 = vmatpush2.msra.mxu0 0.0
  %1334 = vmatprep.subr.mxu0 0.0
  %1335 = vmatpush2.msra.mxu0 0.0
  %1336 = vmatprep.subr.mxu0 0.0
  %1337 = vmatpush2.msra.mxu0 0.0
  %1338 = vmatprep.subr.mxu0 0.0
  %1339 = vmatpush2.msra.mxu0 0.0
  %1340 = vmatprep.subr.mxu0 0.0
  %1341 = vmatpush2.msra.mxu0 0.0
  %1342 = vmatprep.subr.mxu0 0.0
  %1343 = vmatpush2.msra.mxu0 0.0
  %1344 = vmatprep.subr.mxu0 0.0
  %1345 = vmatpush2.msra.mxu0 0.0
  %1346 = vmatprep.mubr.f32.mxu0 0.0
  %1347 = vmatmul.mubr.f32.gmra.mxu0 %v1280
  %v1348 = vpop.f32.mrf.mxu0
  %v1349 = vadd.f32 %v974, %v1348
  %v1350 = vpop.f32.mrf.mxu0
  %1351 = vdwg.mxu0
  %v1352 = vmul.f32 %v1349, %v34
  %v1353 = vtanh.pop %v1352
  %v1354 = vmul.f32 %v1353, %v34
  %v1355 = vadd.f32 %v1354, %v35
  %v1356 = vmul.f32 %v1355, %v1266
  %1358 = vrot.lane.b32.xlu0 %v1355, 64
  %v1359 = vpop.permute.xlu0 %1358
  %v1361 = vmul.f32 %v1355, %v1359
  %1363 = vrot.lane.b32.xlu0 %v1361, 32
  %v1364 = vpop.permute.xlu0 %1363
  %v1366 = vadd.f32 %v1356, %v1364
  %v1367 = vtanh.pop %v1366
  %1369 = vrot.lane.b32.xlu0 %v1367, 64
  %v1370 = vpop.permute.xlu0 %1369
  %v1372 = vmul.f32 %v1355, %v1370
  %1375 = vrot.lane.b32.xlu0 %v1372, 64
  %v1376 = vpop.permute.xlu0 %1375
  %v1378 = vsel %vm186, %v672, %v1376
  %v1380 = vsel %vm978, %v1378, 0
  %1382 = vmatprep.subr.mxu0 0.0
  %1383 = vmatpush1.msra.mxu0 0.0
  %1384 = vmatprep.subr.mxu0 0.0
  %1385 = vmatpush1.msra.mxu0 0.0
  %1386 = vmatprep.subr.mxu0 0.0
  %1387 = vmatpush1.msra.mxu0 0.0
  %1388 = vmatprep.subr.mxu0 0.0
  %1389 = vmatpush1.msra.mxu0 0.0
  %1390 = vmatprep.subr.mxu0 0.0
  %1391 = vmatpush1.msra.mxu0 0.0
  %1392 = vmatprep.subr.mxu0 0.0
  %1393 = vmatpush1.msra.mxu0 0.0
  %1394 = vmatprep.subr.mxu0 0.0
  %1395 = vmatpush1.msra.mxu0 0.0
  %1396 = vmatprep.subr.mxu0 0.0
  %1397 = vmatpush1.msra.mxu0 0.0
  %1398 = vmatprep.subr.mxu0 0.0
  %1399 = vmatpush1.msra.mxu0 %v968
  %1400 = vmatprep.subr.mxu0 0.0
  %1401 = vmatpush1.msra.mxu0 %v967
  %1402 = vmatprep.subr.mxu0 0.0
  %1403 = vmatpush1.msra.mxu0 %v966
  %1404 = vmatprep.subr.mxu0 0.0
  %1405 = vmatpush1.msra.mxu0 %v965
  %1406 = vmatprep.subr.mxu0 0.0
  %1407 = vmatpush1.msra.mxu0 %v964
  %1408 = vmatprep.subr.mxu0 0.0
  %1409 = vmatpush1.msra.mxu0 %v963
  %1410 = vmatprep.subr.mxu0 0.0
  %1411 = vmatpush1.msra.mxu0 %v962
  %1412 = vmatprep.subr.mxu0 0.0
  %1413 = vmatpush1.msra.mxu0 %v961
  %1414 = vmatprep.subr.mxu0 0.0
  %1415 = vmatpush2.msra.mxu0 0.0
  %1416 = vmatprep.subr.mxu0 0.0
  %1417 = vmatpush2.msra.mxu0 0.0
  %1418 = vmatprep.subr.mxu0 0.0
  %1419 = vmatpush2.msra.mxu0 0.0
  %1420 = vmatprep.subr.mxu0 0.0
  %1421 = vmatpush2.msra.mxu0 0.0
  %1422 = vmatprep.subr.mxu0 0.0
  %1423 = vmatpush2.msra.mxu0 0.0
  %1424 = vmatprep.subr.mxu0 0.0
  %1425 = vmatpush2.msra.mxu0 0.0
  %1426 = vmatprep.subr.mxu0 0.0
  %1427 = vmatpush2.msra.mxu0 0.0
  %1428 = vmatprep.subr.mxu0 0.0
  %1429 = vmatpush2.msra.mxu0 0.0
  %1430 = vmatprep.subr.mxu0 0.0
  %1431 = vmatpush2.msra.mxu0 0.0
  %1432 = vmatprep.subr.mxu0 0.0
  %1433 = vmatpush2.msra.mxu0 0.0
  %1434 = vmatprep.subr.mxu0 0.0
  %1435 = vmatpush2.msra.mxu0 0.0
  %1436 = vmatprep.subr.mxu0 0.0
  %1437 = vmatpush2.msra.mxu0 0.0
  %1438 = vmatprep.subr.mxu0 0.0
  %1439 = vmatpush2.msra.mxu0 0.0
  %1440 = vmatprep.subr.mxu0 0.0
  %1441 = vmatpush2.msra.mxu0 0.0
  %1442 = vmatprep.subr.mxu0 0.0
  %1443 = vmatpush2.msra.mxu0 0.0
  %1444 = vmatprep.subr.mxu0 0.0
  %1445 = vmatpush2.msra.mxu0 0.0
  %1446 = vmatprep.mubr.f32.mxu0 0.0
  %1447 = vmatmul.mubr.f32.gmra.mxu0 %v1380
  %v1448 = vpop.f32.mrf.mxu0
  %v1449 = vadd.f32 %v974, %v1448
  %v1450 = vpop.f32.mrf.mxu0
  %1451 = vdwg.mxu0
  %v1452 = vmul.f32 %v1449, %v34
  %v1453 = vtanh.pop %v1452
  %v1454 = vmul.f32 %v1453, %v34
  %v1455 = vadd.f32 %v1454, %v35
  %v1456 = vmul.f32 %v1455, %v1366
  %1458 = vrot.lane.b32.xlu0 %v1455, 64
  %v1459 = vpop.permute.xlu0 %1458
  %v1461 = vmul.f32 %v1455, %v1459
  %1463 = vrot.lane.b32.xlu0 %v1461, 32
  %v1464 = vpop.permute.xlu0 %1463
  %v1466 = vadd.f32 %v1456, %v1464
  %v1467 = vtanh.pop %v1466
  %1469 = vrot.lane.b32.xlu0 %v1467, 64
  %v1470 = vpop.permute.xlu0 %1469
  %v1472 = vmul.f32 %v1455, %v1470
  %1475 = vrot.lane.b32.xlu0 %v1472, 64
  %v1476 = vpop.permute.xlu0 %1475
  %v1478 = vsel %vm186, %v769, %v1476
  %v1480 = vsel %vm978, %v1478, 0
  %1482 = vmatprep.subr.mxu0 0.0
  %1483 = vmatpush1.msra.mxu0 0.0
  %1484 = vmatprep.subr.mxu0 0.0
  %1485 = vmatpush1.msra.mxu0 0.0
  %1486 = vmatprep.subr.mxu0 0.0
  %1487 = vmatpush1.msra.mxu0 0.0
  %1488 = vmatprep.subr.mxu0 0.0
  %1489 = vmatpush1.msra.mxu0 0.0
  %1490 = vmatprep.subr.mxu0 0.0
  %1491 = vmatpush1.msra.mxu0 0.0
  %1492 = vmatprep.subr.mxu0 0.0
  %1493 = vmatpush1.msra.mxu0 0.0
  %1494 = vmatprep.subr.mxu0 0.0
  %1495 = vmatpush1.msra.mxu0 0.0
  %1496 = vmatprep.subr.mxu0 0.0
  %1497 = vmatpush1.msra.mxu0 0.0
  %1498 = vmatprep.subr.mxu0 0.0
  %1499 = vmatpush1.msra.mxu0 %v968
  %1500 = vmatprep.subr.mxu0 0.0
  %1501 = vmatpush1.msra.mxu0 %v967
  %1502 = vmatprep.subr.mxu0 0.0
  %1503 = vmatpush1.msra.mxu0 %v966
  %1504 = vmatprep.subr.mxu0 0.0
  %1505 = vmatpush1.msra.mxu0 %v965
  %1506 = vmatprep.subr.mxu0 0.0
  %1507 = vmatpush1.msra.mxu0 %v964
  %1508 = vmatprep.subr.mxu0 0.0
  %1509 = vmatpush1.msra.mxu0 %v963
  %1510 = vmatprep.subr.mxu0 0.0
  %1511 = vmatpush1.msra.mxu0 %v962
  %1512 = vmatprep.subr.mxu0 0.0
  %1513 = vmatpush1.msra.mxu0 %v961
  %1514 = vmatprep.subr.mxu0 0.0
  %1515 = vmatpush2.msra.mxu0 0.0
  %1516 = vmatprep.subr.mxu0 0.0
  %1517 = vmatpush2.msra.mxu0 0.0
  %1518 = vmatprep.subr.mxu0 0.0
  %1519 = vmatpush2.msra.mxu0 0.0
  %1520 = vmatprep.subr.mxu0 0.0
  %1521 = vmatpush2.msra.mxu0 0.0
  %1522 = vmatprep.subr.mxu0 0.0
  %1523 = vmatpush2.msra.mxu0 0.0
  %1524 = vmatprep.subr.mxu0 0.0
  %1525 = vmatpush2.msra.mxu0 0.0
  %1526 = vmatprep.subr.mxu0 0.0
  %1527 = vmatpush2.msra.mxu0 0.0
  %1528 = vmatprep.subr.mxu0 0.0
  %1529 = vmatpush2.msra.mxu0 0.0
  %1530 = vmatprep.subr.mxu0 0.0
  %1531 = vmatpush2.msra.mxu0 0.0
  %1532 = vmatprep.subr.mxu0 0.0
  %1533 = vmatpush2.msra.mxu0 0.0
  %1534 = vmatprep.subr.mxu0 0.0
  %1535 = vmatpush2.msra.mxu0 0.0
  %1536 = vmatprep.subr.mxu0 0.0
  %1537 = vmatpush2.msra.mxu0 0.0
  %1538 = vmatprep.subr.mxu0 0.0
  %1539 = vmatpush2.msra.mxu0 0.0
  %1540 = vmatprep.subr.mxu0 0.0
  %1541 = vmatpush2.msra.mxu0 0.0
  %1542 = vmatprep.subr.mxu0 0.0
  %1543 = vmatpush2.msra.mxu0 0.0
  %1544 = vmatprep.subr.mxu0 0.0
  %1545 = vmatpush2.msra.mxu0 0.0
  %1546 = vmatprep.mubr.f32.mxu0 0.0
  %1547 = vmatmul.mubr.f32.gmra.mxu0 %v1480
  %v1548 = vpop.f32.mrf.mxu0
  %v1549 = vadd.f32 %v974, %v1548
  %v1550 = vpop.f32.mrf.mxu0
  %1551 = vdwg.mxu0
  %v1552 = vmul.f32 %v1549, %v34
  %v1553 = vtanh.pop %v1552
  %v1554 = vmul.f32 %v1553, %v34
  %v1555 = vadd.f32 %v1554, %v35
  %v1556 = vmul.f32 %v1555, %v1466
  %1558 = vrot.lane.b32.xlu0 %v1555, 64
  %v1559 = vpop.permute.xlu0 %1558
  %v1561 = vmul.f32 %v1555, %v1559
  %1563 = vrot.lane.b32.xlu0 %v1561, 32
  %v1564 = vpop.permute.xlu0 %1563
  %v1566 = vadd.f32 %v1556, %v1564
  %v1567 = vtanh.pop %v1566
  %1569 = vrot.lane.b32.xlu0 %v1567, 64
  %v1570 = vpop.permute.xlu0 %1569
  %v1572 = vmul.f32 %v1555, %v1570
  %1575 = vrot.lane.b32.xlu0 %v1572, 64
  %v1576 = vpop.permute.xlu0 %1575
  %v1578 = vsel %vm186, %v866, %v1576
  %v1580 = vsel %vm978, %v1578, 0
  %1582 = vmatprep.subr.mxu0 0.0
  %1583 = vmatpush1.msra.mxu0 0.0
  %1584 = vmatprep.subr.mxu0 0.0
  %1585 = vmatpush1.msra.mxu0 0.0
  %1586 = vmatprep.subr.mxu0 0.0
  %1587 = vmatpush1.msra.mxu0 0.0
  %1588 = vmatprep.subr.mxu0 0.0
  %1589 = vmatpush1.msra.mxu0 0.0
  %1590 = vmatprep.subr.mxu0 0.0
  %1591 = vmatpush1.msra.mxu0 0.0
  %1592 = vmatprep.subr.mxu0 0.0
  %1593 = vmatpush1.msra.mxu0 0.0
  %1594 = vmatprep.subr.mxu0 0.0
  %1595 = vmatpush1.msra.mxu0 0.0
  %1596 = vmatprep.subr.mxu0 0.0
  %1597 = vmatpush1.msra.mxu0 0.0
  %1598 = vmatprep.subr.mxu0 0.0
  %1599 = vmatpush1.msra.mxu0 %v968
  %1600 = vmatprep.subr.mxu0 0.0
  %1601 = vmatpush1.msra.mxu0 %v967
  %1602 = vmatprep.subr.mxu0 0.0
  %1603 = vmatpush1.msra.mxu0 %v966
  %1604 = vmatprep.subr.mxu0 0.0
  %1605 = vmatpush1.msra.mxu0 %v965
  %1606 = vmatprep.subr.mxu0 0.0
  %1607 = vmatpush1.msra.mxu0 %v964
  %1608 = vmatprep.subr.mxu0 0.0
  %1609 = vmatpush1.msra.mxu0 %v963
  %1610 = vmatprep.subr.mxu0 0.0
  %1611 = vmatpush1.msra.mxu0 %v962
  %1612 = vmatprep.subr.mxu0 0.0
  %1613 = vmatpush1.msra.mxu0 %v961
  %1614 = vmatprep.subr.mxu0 0.0
  %1615 = vmatpush2.msra.mxu0 0.0
  %1616 = vmatprep.subr.mxu0 0.0
  %1617 = vmatpush2.msra.mxu0 0.0
  %1618 = vmatprep.subr.mxu0 0.0
  %1619 = vmatpush2.msra.mxu0 0.0
  %1620 = vmatprep.subr.mxu0 0.0
  %1621 = vmatpush2.msra.mxu0 0.0
  %1622 = vmatprep.subr.mxu0 0.0
  %1623 = vmatpush2.msra.mxu0 0.0
  %1624 = vmatprep.subr.mxu0 0.0
  %1625 = vmatpush2.msra.mxu0 0.0
  %1626 = vmatprep.subr.mxu0 0.0
  %1627 = vmatpush2.msra.mxu0 0.0
  %1628 = vmatprep.subr.mxu0 0.0
  %1629 = vmatpush2.msra.mxu0 0.0
  %1630 = vmatprep.subr.mxu0 0.0
  %1631 = vmatpush2.msra.mxu0 0.0
  %1632 = vmatprep.subr.mxu0 0.0
  %1633 = vmatpush2.msra.mxu0 0.0
  %1634 = vmatprep.subr.mxu0 0.0
  %1635 = vmatpush2.msra.mxu0 0.0
  %1636 = vmatprep.subr.mxu0 0.0
  %1637 = vmatpush2.msra.mxu0 0.0
  %1638 = vmatprep.subr.mxu0 0.0
  %1639 = vmatpush2.msra.mxu0 0.0
  %1640 = vmatprep.subr.mxu0 0.0
  %1641 = vmatpush2.msra.mxu0 0.0
  %1642 = vmatprep.subr.mxu0 0.0
  %1643 = vmatpush2.msra.mxu0 0.0
  %1644 = vmatprep.subr.mxu0 0.0
  %1645 = vmatpush2.msra.mxu0 0.0
  %1646 = vmatprep.mubr.f32.mxu0 0.0
  %1647 = vmatmul.mubr.f32.gmra.mxu0 %v1580
  %v1648 = vpop.f32.mrf.mxu0
  %v1649 = vadd.f32 %v974, %v1648
  %v1650 = vpop.f32.mrf.mxu0
  %1651 = vdwg.mxu0
  %v1652 = vmul.f32 %v1649, %v34
  %v1653 = vtanh.pop %v1652
  %v1654 = vmul.f32 %v1653, %v34
  %v1655 = vadd.f32 %v1654, %v35
  %v1656 = vmul.f32 %v1655, %v1566
  %1658 = vrot.lane.b32.xlu0 %v1655, 64
  %v1659 = vpop.permute.xlu0 %1658
  %v1661 = vmul.f32 %v1655, %v1659
  %1663 = vrot.lane.b32.xlu0 %v1661, 32
  %v1664 = vpop.permute.xlu0 %1663
  %v1666 = vadd.f32 %v1656, %v1664
  %v1667 = vtanh.pop %v1666
  %1669 = vrot.lane.b32.xlu0 %v1667, 64
  %v1670 = vpop.permute.xlu0 %1669
  %v1672 = vmul.f32 %v1655, %v1670
  %1674 = vrot.lane.b32.xlu0 %v960, 32
  %v1675 = vpop.permute.xlu0 %1674
  %1678 = vrot.lane.b32.xlu0 %v1672, 64
  %v1679 = vpop.permute.xlu0 %1678
  %v1681 = vsel %vm186, %v1675, %v1679
  %v1683 = vsel %vm978, %v1681, 0
  %1685 = vmatprep.subr.mxu0 0.0
  %1686 = vmatpush1.msra.mxu0 0.0
  %1687 = vmatprep.subr.mxu0 0.0
  %1688 = vmatpush1.msra.mxu0 0.0
  %1689 = vmatprep.subr.mxu0 0.0
  %1690 = vmatpush1.msra.mxu0 0.0
  %1691 = vmatprep.subr.mxu0 0.0
  %1692 = vmatpush1.msra.mxu0 0.0
  %1693 = vmatprep.subr.mxu0 0.0
  %1694 = vmatpush1.msra.mxu0 0.0
  %1695 = vmatprep.subr.mxu0 0.0
  %1696 = vmatpush1.msra.mxu0 0.0
  %1697 = vmatprep.subr.mxu0 0.0
  %1698 = vmatpush1.msra.mxu0 0.0
  %1699 = vmatprep.subr.mxu0 0.0
  %1700 = vmatpush1.msra.mxu0 0.0
  %1701 = vmatprep.subr.mxu0 0.0
  %1702 = vmatpush1.msra.mxu0 %v968
  %1703 = vmatprep.subr.mxu0 0.0
  %1704 = vmatpush1.msra.mxu0 %v967
  %1705 = vmatprep.subr.mxu0 0.0
  %1706 = vmatpush1.msra.mxu0 %v966
  %1707 = vmatprep.subr.mxu0 0.0
  %1708 = vmatpush1.msra.mxu0 %v965
  %1709 = vmatprep.subr.mxu0 0.0
  %1710 = vmatpush1.msra.mxu0 %v964
  %1711 = vmatprep.subr.mxu0 0.0
  %1712 = vmatpush1.msra.mxu0 %v963
  %1713 = vmatprep.subr.mxu0 0.0
  %1714 = vmatpush1.msra.mxu0 %v962
  %1715 = vmatprep.subr.mxu0 0.0
  %1716 = vmatpush1.msra.mxu0 %v961
  %1717 = vmatprep.subr.mxu0 0.0
  %1718 = vmatpush2.msra.mxu0 0.0
  %1719 = vmatprep.subr.mxu0 0.0
  %1720 = vmatpush2.msra.mxu0 0.0
  %1721 = vmatprep.subr.mxu0 0.0
  %1722 = vmatpush2.msra.mxu0 0.0
  %1723 = vmatprep.subr.mxu0 0.0
  %1724 = vmatpush2.msra.mxu0 0.0
  %1725 = vmatprep.subr.mxu0 0.0
  %1726 = vmatpush2.msra.mxu0 0.0
  %1727 = vmatprep.subr.mxu0 0.0
  %1728 = vmatpush2.msra.mxu0 0.0
  %1729 = vmatprep.subr.mxu0 0.0
  %1730 = vmatpush2.msra.mxu0 0.0
  %1731 = vmatprep.subr.mxu0 0.0
  %1732 = vmatpush2.msra.mxu0 0.0
  %1733 = vmatprep.subr.mxu0 0.0
  %1734 = vmatpush2.msra.mxu0 0.0
  %1735 = vmatprep.subr.mxu0 0.0
  %1736 = vmatpush2.msra.mxu0 0.0
  %1737 = vmatprep.subr.mxu0 0.0
  %1738 = vmatpush2.msra.mxu0 0.0
  %1739 = vmatprep.subr.mxu0 0.0
  %1740 = vmatpush2.msra.mxu0 0.0
  %1741 = vmatprep.subr.mxu0 0.0
  %1742 = vmatpush2.msra.mxu0 0.0
  %1743 = vmatprep.subr.mxu0 0.0
  %1744 = vmatpush2.msra.mxu0 0.0
  %1745 = vmatprep.subr.mxu0 0.0
  %1746 = vmatpush2.msra.mxu0 0.0
  %1747 = vmatprep.subr.mxu0 0.0
  %1748 = vmatpush2.msra.mxu0 0.0
  %1749 = vmatprep.mubr.f32.mxu0 0.0
  %1750 = vmatmul.mubr.f32.gmra.mxu0 %v1683
  %v1751 = vpop.f32.mrf.mxu0
  %v1752 = vadd.f32 %v974, %v1751
  %v1753 = vpop.f32.mrf.mxu0
  %1754 = vdwg.mxu0
  %v1755 = vmul.f32 %v1752, %v34
  %v1756 = vtanh.pop %v1755
  %v1757 = vmul.f32 %v1756, %v34
  %v1758 = vadd.f32 %v1757, %v35
  %v1759 = vmul.f32 %v1758, %v1666
  %1761 = vrot.lane.b32.xlu0 %v1758, 64
  %v1762 = vpop.permute.xlu0 %1761
  %v1764 = vmul.f32 %v1758, %v1762
  %1766 = vrot.lane.b32.xlu0 %v1764, 32
  %v1767 = vpop.permute.xlu0 %1766
  %v1769 = vadd.f32 %v1759, %v1767
  %v1770 = vtanh.pop %v1769
  %1772 = vrot.lane.b32.xlu0 %v1770, 64
  %v1773 = vpop.permute.xlu0 %1772
  %v1775 = vmul.f32 %v1758, %v1773
  %v1776 = vld [vmem:[%s6] sm:$0xff]
  %v1777 = vld [vmem:[%s6 + $0x8] sm:$0xff]
  %v1778 = vld [vmem:[%s6 + $0x10] sm:$0xff]
  %v1779 = vld [vmem:[%s6 + $0x18] sm:$0xff]
  %v1780 = vld [vmem:[%s7] sm:$0x1]
  %v1782 = vlaneseq
  %v1783 = vshrl.u32 %v1782, 7
  %v1784 = vsub.s32 0, %v1783
  %v1785 = vrot.slane %v1780, %v1784
  %1788 = vrot.lane.b32.xlu0 %v1775, 32
  %v1789 = vpop.permute.xlu0 %1788
  %v1790 = vsel %vm186, %v1789, 0
  %1792 = vmatprep.subr.mxu0 0.0
  %1793 = vmatpush1.msra.mxu0 0.0
  %1794 = vmatprep.subr.mxu0 0.0
  %1795 = vmatpush1.msra.mxu0 0.0
  %1796 = vmatprep.subr.mxu0 0.0
  %1797 = vmatpush1.msra.mxu0 0.0
  %1798 = vmatprep.subr.mxu0 0.0
  %1799 = vmatpush1.msra.mxu0 0.0
  %1800 = vmatprep.subr.mxu0 0.0
  %1801 = vmatpush1.msra.mxu0 0.0
  %1802 = vmatprep.subr.mxu0 0.0
  %1803 = vmatpush1.msra.mxu0 0.0
  %1804 = vmatprep.subr.mxu0 0.0
  %1805 = vmatpush1.msra.mxu0 0.0
  %1806 = vmatprep.subr.mxu0 0.0
  %1807 = vmatpush1.msra.mxu0 0.0
  %1808 = vmatprep.subr.mxu0 0.0
  %1809 = vmatpush1.msra.mxu0 0.0
  %1810 = vmatprep.subr.mxu0 0.0
  %1811 = vmatpush1.msra.mxu0 0.0
  %1812 = vmatprep.subr.mxu0 0.0
  %1813 = vmatpush1.msra.mxu0 0.0
  %1814 = vmatprep.subr.mxu0 0.0
  %1815 = vmatpush1.msra.mxu0 0.0
  %1816 = vmatprep.subr.mxu0 0.0
  %1817 = vmatpush1.msra.mxu0 %v1779
  %1818 = vmatprep.subr.mxu0 0.0
  %1819 = vmatpush1.msra.mxu0 %v1778
  %1820 = vmatprep.subr.mxu0 0.0
  %1821 = vmatpush1.msra.mxu0 %v1777
  %1822 = vmatprep.subr.mxu0 0.0
  %1823 = vmatpush1.msra.mxu0 %v1776
  %1824 = vmatprep.subr.mxu0 0.0
  %1825 = vmatpush2.msra.mxu0 0.0
  %1826 = vmatprep.subr.mxu0 0.0
  %1827 = vmatpush2.msra.mxu0 0.0
  %1828 = vmatprep.subr.mxu0 0.0
  %1829 = vmatpush2.msra.mxu0 0.0
  %1830 = vmatprep.subr.mxu0 0.0
  %1831 = vmatpush2.msra.mxu0 0.0
  %1832 = vmatprep.subr.mxu0 0.0
  %1833 = vmatpush2.msra.mxu0 0.0
  %1834 = vmatprep.subr.mxu0 0.0
  %1835 = vmatpush2.msra.mxu0 0.0
  %1836 = vmatprep.subr.mxu0 0.0
  %1837 = vmatpush2.msra.mxu0 0.0
  %1838 = vmatprep.subr.mxu0 0.0
  %1839 = vmatpush2.msra.mxu0 0.0
  %1840 = vmatprep.subr.mxu0 0.0
  %1841 = vmatpush2.msra.mxu0 0.0
  %1842 = vmatprep.subr.mxu0 0.0
  %1843 = vmatpush2.msra.mxu0 0.0
  %1844 = vmatprep.subr.mxu0 0.0
  %1845 = vmatpush2.msra.mxu0 0.0
  %1846 = vmatprep.subr.mxu0 0.0
  %1847 = vmatpush2.msra.mxu0 0.0
  %1848 = vmatprep.subr.mxu0 0.0
  %1849 = vmatpush2.msra.mxu0 0.0
  %1850 = vmatprep.subr.mxu0 0.0
  %1851 = vmatpush2.msra.mxu0 0.0
  %1852 = vmatprep.subr.mxu0 0.0
  %1853 = vmatpush2.msra.mxu0 0.0
  %1854 = vmatprep.subr.mxu0 0.0
  %1855 = vmatpush2.msra.mxu0 0.0
  %1856 = vmatprep.mubr.f32.mxu0 0.0
  %1857 = vmatmul.mubr.f32.gmra.mxu0 %v1790
  %v1858 = vpop.f32.mrf.mxu0
  %v1859 = vadd.f32 %v1785, %v1858
  %v1860 = vpop.f32.mrf.mxu0
  %1861 = vdwg.mxu0
  %vm1862 = vcmask 31744
  %1863 = vst.msk [vmem:[%s8] sm:$0xff] %vm1862, %v1859
  // Predicated region
  $region34: #{lstm_model_forward.1} parent=0 // pred_check
    _
  $region35: #{lstm_model_forward.1} parent=0 // pred_check_branch
    %1865 = sbr.rel (0) target = $region37
  $region36: #{lstm_model_forward.1} parent=0 // pred_region
    _
  $region37: #{lstm_model_forward.1} parent=0 // pred_fallthru
    _
  // Predicated region
  $region38: #{lstm_model_forward.1} parent=0 // pred_check
    _
  $region39: #{lstm_model_forward.1} parent=0 // pred_check_branch
    %1867 = sbr.rel (0) target = $region41
  $region40: #{lstm_model_forward.1} parent=0 // pred_region
    _
  $region41: #{lstm_model_forward.1} parent=0 // pred_fallthru
    _

</llo_original>
